<compile_context>
chip_gen: v5e
topology: v5e:2x2
jax: 0.10.0
libtpu: 0.0.40
codegen_flags: <defaults>
</compile_context>

<pallas_src>
import math

import jax
import jax.numpy as jnp
from jax import lax
from jax.experimental import pallas as pl
from jax.experimental.pallas import tpu as pltpu


# Width of the zero halo built in VMEM.  8 keeps the center (dw=1) slice and
# all concats aligned to the f32 (8, 128) tile; only 1 column is logically
# needed for padding=1.
_W_PAD = 8


def _round_up(x, m):
    return (x + m - 1) // m * m


def _pick_batch_block(batch, resident_bytes_fn, budget):
    """Largest divisor of `batch` fitting the VMEM budget, preferring >= 2 grid steps."""
    divs = sorted((d for d in range(1, batch + 1) if batch % d == 0), reverse=True)
    # Prefer >= 2 grid steps: v7x has 2 TensorCores, and a multi-step grid is
    # what lets the input/output DMA pipeline overlap with compute.
    preferred = [d for d in divs if batch // d >= 2] or divs
    for d in preferred:
        if resident_bytes_fn(d) <= budget:
            return d
    return 1   # TODO(synk): fall back to H-row tiling instead of hoping it fits.


def seg_head_kernel(x_ref, w1_ref, bias_ref, w2_ref, out_ref, patch_ref):
    # x_ref:     (Bb, H, W, Cin)   bf16 activation block (DMA'd half-width)
    # w1_ref:    (Kp, Cmid_pad)    bf16 folded 3x3 weights (dense K, zero tail rows)
    # bias_ref:  (1, Cmid_pad)     f32 folded BN bias (zero in the pad lanes)
    # w2_ref:    (Cmid_pad, NCp)   bf16 1x1 weights (zero pad rows/cols)
    # out_ref:   (Bb*H*W, NCp)     bf16 lane-dense logits slab
    # patch_ref: (Bb*H*W, Kp)      bf16 densely packed im2col scratch
    Bb, H, W, Cin = x_ref.shape
    M, Kp = patch_ref.shape
    cdt = patch_ref.dtype
    P = _W_PAD

    # ---- Zero halo built in VMEM with tile-aligned concats (no HBM round
    # trip).  Staging is f32: bf16 only over the DMA and in the packed stores.
    x = x_ref[...].astype(jnp.float32)                          # (Bb, H, W, Cin)
    zw = jnp.zeros((Bb, H, P, Cin), jnp.float32)
    xp = jnp.concatenate([zw, x, zw], axis=2)                   # (Bb, H, W+2P, Cin)
    zh = jnp.zeros((Bb, 1, W + 2 * P, Cin), jnp.float32)
    xp = jnp.concatenate([zh, xp, zh], axis=1)                  # (Bb, H+2, W+2P, Cin)

    def tap(t):
        dh, dw = divmod(t, 3)
        # dw=1 starts at P (sublane-tile aligned); dw=0/2 are the +-1 shifted
        # neighbours (one relayout each).
        # TODO(synk): derive the +-1 shifts from the aligned slab with
        # pltpu.roll on the XLU once verified for this layout.
        w0 = P - 1 + dw
        return xp[:, dh:dh + H, w0:w0 + W, :].reshape(M, Cin)   # f32 (M, Cin)

    # ---- im2col: taps packed densely (tap t -> columns [t*Cin, (t+1)*Cin)),
    # grouped so every scratch store is a full, 128-lane-aligned slab.  Only
    # the final group carries the zero tail pad (fused into its store).
    tpg = min(9, 128 // math.gcd(Cin, 128))        # taps per 128-aligned group
    col = 0
    for g0 in range(0, 9, tpg):
        g1 = min(g0 + tpg, 9)
        pieces = [tap(t) for t in range(g0, g1)]
        width = (g1 - g0) * Cin
        store_w = width if g1 < 9 else Kp - col    # pad only the last group
        if store_w != width:
            pieces.append(jnp.zeros((M, store_w - width), jnp.float32))
        chunk = pieces[0] if len(pieces) == 1 else jnp.concatenate(pieces, axis=-1)
        patch_ref[:, col:col + store_w] = chunk.astype(cdt)
        col += store_w

    # ---- Conv3x3 as a single dense-K MXU matmul, f32 accumulation.
    acc = jnp.dot(patch_ref[...], w1_ref[...],
                  preferred_element_type=jnp.float32)           # (M, Cmid_pad) f32

    # ---- Folded BatchNorm bias + ReLU, lane-dense f32 on the VPU (v5e-safe).
    y = jnp.maximum(acc + bias_ref[...], 0.0)

    # ---- Conv1x1 = channel matmul; classes are lane-dense (zero pad rows of
    # w2 keep the padded Cmid lanes from contributing).
    out = jnp.dot(y.astype(w2_ref.dtype), w2_ref[...],
                  preferred_element_type=jnp.float32)           # (M, NCp) f32
    out_ref[...] = out.astype(out_ref.dtype)                    # bf16 writeback


def seg_head_forward(x_nhwc, w1_hwio, bn_gamma, bn_beta, bn_mean, bn_var,
                     w2_io, eps=1e-5, compute_dtype=jnp.bfloat16):
    """x_nhwc: (B, H, W, Cin) f32.  Returns (B, H, W, num_classes) f32."""
    B, H, W, Cin = x_nhwc.shape
    KH, KW, Cin_w, Cmid = w1_hwio.shape
    assert (KH, KW) == (3, 3) and Cin_w == Cin
    Cmid_w2, NC = w2_io.shape
    assert Cmid_w2 == Cmid
    if W % 8:
        raise NotImplementedError("W must be a multiple of 8 (TPU sublane tiling)")

    k_real = 9 * Cin
    kp = _round_up(k_real, 128)        # dense im2col K, tail-padded to a lane tile
    cmid_pad = _round_up(Cmid, 128)    # lane-dense hidden width
    ncp = _round_up(NC, 128)           # lane-dense class width
    act = jnp.dtype(compute_dtype).itemsize

    # ---- Fold eval-mode BatchNorm into conv1 weights + a bias row; pad
    # everything lane-dense with zeros so no masked vreg ops are needed.
    scale = bn_gamma / jnp.sqrt(bn_var + eps)                             # (Cmid,)
    bias = (jnp.zeros((1, cmid_pad), jnp.float32)
            .at[0, :Cmid].set(bn_beta - bn_mean * scale))
    w1_folded = (w1_hwio * scale[None, None, None, :]).reshape(k_real, Cmid)
    w1_flat = (jnp.zeros((kp, cmid_pad), jnp.float32)
               .at[:k_real, :Cmid].set(w1_folded)
               .astype(compute_dtype))
    w2_pad = (jnp.zeros((cmid_pad, ncp), jnp.float32)
              .at[:Cmid, :NC].set(w2_io)
              .astype(compute_dtype))

    # Activations travel to the kernel in bf16: halves the input DMA bytes.
    x_c = x_nhwc.astype(compute_dtype)

    def resident_vmem_bytes(bb):
        m = bb * H * W
        x_blocks = 2 * bb * H * W * Cin * act                      # double-buffered input
        halo = bb * (H + 2) * (W + 2 * _W_PAD) * Cin * 4           # f32 staging copy
        staging = 2 * m * 128 * 4                                  # live tap/chunk temporaries
        patch = m * kp * act                                       # im2col scratch
        mids = m * cmid_pad * (4 + act)                            # f32 acc + bf16 y
        out_blocks = 2 * m * ncp * act                             # double-buffered output
        weights = 2 * ((kp * cmid_pad + cmid_pad * ncp) * act + cmid_pad * 4)
        return x_blocks + halo + staging + patch + mids + out_blocks + weights

    try:
        vmem_cap = int(pltpu.get_tpu_info().vmem_capacity_bytes)
    except Exception:
        vmem_cap = 64 * 1024 * 1024          # conservative (v7x physical VMEM)
    budget = (3 * vmem_cap) // 4             # leave headroom for compiler temporaries

    Bb = _pick_batch_block(B, resident_vmem_bytes, budget)
    grid = (B // Bb,)

    grid_spec = pltpu.PrefetchScalarGridSpec(
        num_scalar_prefetch=0,
        grid=grid,
        in_specs=[
            pl.BlockSpec((Bb, H, W, Cin), lambda b: (b, 0, 0, 0)),
            # Grid-invariant weights (constant index_map); see Buffered(1) TODO.
            pl.BlockSpec((kp, cmid_pad), lambda b: (0, 0)),
            pl.BlockSpec((1, cmid_pad), lambda b: (0, 0)),
            pl.BlockSpec((cmid_pad, ncp), lambda b: (0, 0)),
        ],
        out_specs=pl.BlockSpec((Bb * H * W, ncp), lambda b: (b, 0)),
        scratch_shapes=[pltpu.VMEM((Bb * H * W, kp), compute_dtype)],
    )

    out_flat = pl.pallas_call(
        seg_head_kernel,
        out_shape=jax.ShapeDtypeStruct((B * H * W, ncp), compute_dtype),
        grid_spec=grid_spec,
        compiler_params=pltpu.CompilerParams(
            dimension_semantics=("parallel",),
            vmem_limit_bytes=int(budget)),
    )(x_c, w1_flat, bias, w2_pad)

    # Slice the padded classes away, upcast, restore spatial shape (cheap, XLA).
    return out_flat[:, :NC].astype(jnp.float32).reshape(B, H, W, NC)


def seg_head_reference(x_nhwc, w1_hwio, bn_gamma, bn_beta, bn_mean, bn_var,
                       w2_io, eps=1e-5, compute_dtype=jnp.bfloat16):
    """Pure-JAX reference with the same bf16 operand quantization (f32 output)."""
    scale = bn_gamma / jnp.sqrt(bn_var + eps)
    bias = bn_beta - bn_mean * scale
    w1f = (w1_hwio * scale[None, None, None, :]).astype(compute_dtype)
    dn = lax.conv_dimension_numbers(x_nhwc.shape, w1f.shape,
                                    ("NHWC", "HWIO", "NHWC"))
    y = lax.conv_general_dilated(x_nhwc.astype(compute_dtype), w1f, (1, 1),
                                 "SAME", dimension_numbers=dn,
                                 preferred_element_type=jnp.float32)
    y = jnp.maximum(y + bias, 0.0)
    B, H, W, Cmid = y.shape
    out = jnp.dot(y.astype(compute_dtype).reshape(B * H * W, Cmid),
                  w2_io.astype(compute_dtype),
                  preferred_element_type=jnp.float32)
    return out.reshape(B, H, W, w2_io.shape[1])


if __name__ == "__main__":
    # Shapes consistent with Seg_Head(in_channel=64, num_classes=19).
    B, H, W, Cin, Cmid, NC = 2, 16, 16, 64, 64, 19

    key = jax.random.PRNGKey(0)
    k_x, k_w1, k_w2, k_g, k_b, k_m, k_v = jax.random.split(key, 7)

    x = jax.random.normal(k_x, (B, H, W, Cin), dtype=jnp.float32)
    # Conv weights in HWIO layout (PyTorch OIHW -> permute(2, 3, 1, 0)).
    w1 = jax.random.normal(k_w1, (3, 3, Cin, Cmid), dtype=jnp.float32) * 0.05
    w2 = jax.random.normal(k_w2, (Cmid, NC), dtype=jnp.float32) * 0.05
    # Deterministic BatchNorm parameters / running stats (eval mode).
    gamma = 1.0 + 0.1 * jax.random.normal(k_g, (Cmid,), dtype=jnp.float32)
    beta = 0.1 * jax.random.normal(k_b, (Cmid,), dtype=jnp.float32)
    r_mean = 0.1 * jax.random.normal(k_m, (Cmid,), dtype=jnp.float32)
    r_var = 1.0 + 0.1 * jax.random.uniform(k_v, (Cmid,), dtype=jnp.float32)

    fwd = jax.jit(seg_head_forward)
    out = jax.block_until_ready(fwd(x, w1, gamma, beta, r_mean, r_var, w2))

    ref = jax.block_until_ready(
        seg_head_reference(x, w1, gamma, beta, r_mean, r_var, w2))

    assert out.shape == (B, H, W, NC)
    max_err = jnp.max(jnp.abs(out - ref))
    assert jnp.allclose(out, ref, atol=2e-2, rtol=2e-2), f"max abs err {max_err}"
    print("KERNEL_OK")
</pallas_src>

<mosaic_0001>
module attributes {stable_mosaic.version = 11 : i64} {
  func.func @seg_head_kernel(%arg0: i32, %arg1: memref<1x16x16x64xbf16, #tpu.memory_space<vmem>>, %arg2: memref<640x128xbf16, #tpu.memory_space<vmem>>, %arg3: memref<1x128xf32, #tpu.memory_space<vmem>>, %arg4: memref<128x128xbf16, #tpu.memory_space<vmem>>, %arg5: memref<256x128xbf16, #tpu.memory_space<vmem>>, %arg6: memref<256x640xbf16, #tpu.memory_space<vmem>>) attributes {dimension_semantics = [#tpu.dimension_semantics<parallel>], iteration_bounds = array<i64: 2>, scalar_prefetch = 0 : i64, scratch_operands = 1 : i64, tpu.core_type = #tpu.core_type<tc>, window_params = [{transform_indices = @transform_0, window_bounds = array<i64: 1, 16, 16, 64>}, {pipeline_mode = #tpu.pipeline_mode<synchronous>, transform_indices = @transform_1, window_bounds = array<i64: 640, 128>}, {pipeline_mode = #tpu.pipeline_mode<synchronous>, transform_indices = @transform_2, window_bounds = array<i64: 1, 128>}, {pipeline_mode = #tpu.pipeline_mode<synchronous>, transform_indices = @transform_3, window_bounds = array<i64: 128, 128>}, {transform_indices = @transform_4, window_bounds = array<i64: 256, 128>}]} {
    %c0 = arith.constant 0 : index
    %c0_0 = arith.constant 0 : index
    %c0_1 = arith.constant 0 : index
    %c0_2 = arith.constant 0 : index
    %0 = vector.load %arg1[%c0, %c0_0, %c0_1, %c0_2] : memref<1x16x16x64xbf16, #tpu.memory_space<vmem>>, vector<1x16x16x64xbf16>
    %1 = arith.extf %0 : vector<1x16x16x64xbf16> to vector<1x16x16x64xf32>
    %cst = arith.constant 0.000000e+00 : f32
    %2 = vector.broadcast %cst : f32 to vector<1x16x8x64xf32>
    %3 = tpu.concatenate %2, %1, %2 in 2 : vector<1x16x8x64xf32>, vector<1x16x16x64xf32>, vector<1x16x8x64xf32> -> vector<1x16x32x64xf32>
    %cst_3 = arith.constant 0.000000e+00 : f32
    %4 = vector.broadcast %cst_3 : f32 to vector<1x1x32x64xf32>
    %5 = tpu.concatenate %4, %3, %4 in 1 : vector<1x1x32x64xf32>, vector<1x16x32x64xf32>, vector<1x1x32x64xf32> -> vector<1x18x32x64xf32>
    %6 = vector.extract_strided_slice %5 {offsets = [0, 0, 7, 0], sizes = [1, 16, 16, 64], strides = [1, 1, 1, 1]} : vector<1x18x32x64xf32> to vector<1x16x16x64xf32>
    %7 = vector.shape_cast %6 : vector<1x16x16x64xf32> to vector<256x64xf32>
    %8 = vector.extract_strided_slice %5 {offsets = [0, 0, 8, 0], sizes = [1, 16, 16, 64], strides = [1, 1, 1, 1]} : vector<1x18x32x64xf32> to vector<1x16x16x64xf32>
    %9 = vector.shape_cast %8 : vector<1x16x16x64xf32> to vector<256x64xf32>
    %10 = tpu.concatenate %7, %9 in 1 : vector<256x64xf32>, vector<256x64xf32> -> vector<256x128xf32>
    %11 = arith.truncf %10 : vector<256x128xf32> to vector<256x128xbf16>
    %c0_4 = arith.constant 0 : index
    %c0_5 = arith.constant 0 : index
    %12 = vector.load %arg6[%c0_4, %c0_5] : memref<256x640xbf16, #tpu.memory_space<vmem>>, vector<256x128xbf16>
    tpu.vector_store %arg6[%c0_4, %c0_5], %11 {strides = array<i32>} : memref<256x640xbf16, #tpu.memory_space<vmem>>, vector<256x128xbf16>,
    %13 = vector.extract_strided_slice %5 {offsets = [0, 0, 9, 0], sizes = [1, 16, 16, 64], strides = [1, 1, 1, 1]} : vector<1x18x32x64xf32> to vector<1x16x16x64xf32>
    %14 = vector.shape_cast %13 : vector<1x16x16x64xf32> to vector<256x64xf32>
    %15 = vector.extract_strided_slice %5 {offsets = [0, 1, 7, 0], sizes = [1, 16, 16, 64], strides = [1, 1, 1, 1]} : vector<1x18x32x64xf32> to vector<1x16x16x64xf32>
    %16 = vector.shape_cast %15 : vector<1x16x16x64xf32> to vector<256x64xf32>
    %17 = tpu.concatenate %14, %16 in 1 : vector<256x64xf32>, vector<256x64xf32> -> vector<256x128xf32>
    %18 = arith.truncf %17 : vector<256x128xf32> to vector<256x128xbf16>
    %c0_6 = arith.constant 0 : index
    %c128 = arith.constant 128 : index
    %19 = vector.load %arg6[%c0_6, %c128] : memref<256x640xbf16, #tpu.memory_space<vmem>>, vector<256x128xbf16>
    tpu.vector_store %arg6[%c0_6, %c128], %18 {strides = array<i32>} : memref<256x640xbf16, #tpu.memory_space<vmem>>, vector<256x128xbf16>,
    %20 = vector.extract_strided_slice %5 {offsets = [0, 1, 8, 0], sizes = [1, 16, 16, 64], strides = [1, 1, 1, 1]} : vector<1x18x32x64xf32> to vector<1x16x16x64xf32>
    %21 = vector.shape_cast %20 : vector<1x16x16x64xf32> to vector<256x64xf32>
    %22 = vector.extract_strided_slice %5 {offsets = [0, 1, 9, 0], sizes = [1, 16, 16, 64], strides = [1, 1, 1, 1]} : vector<1x18x32x64xf32> to vector<1x16x16x64xf32>
    %23 = vector.shape_cast %22 : vector<1x16x16x64xf32> to vector<256x64xf32>
    %24 = tpu.concatenate %21, %23 in 1 : vector<256x64xf32>, vector<256x64xf32> -> vector<256x128xf32>
    %25 = arith.truncf %24 : vector<256x128xf32> to vector<256x128xbf16>
    %c0_7 = arith.constant 0 : index
    %c256 = arith.constant 256 : index
    %26 = vector.load %arg6[%c0_7, %c256] : memref<256x640xbf16, #tpu.memory_space<vmem>>, vector<256x128xbf16>
    tpu.vector_store %arg6[%c0_7, %c256], %25 {strides = array<i32>} : memref<256x640xbf16, #tpu.memory_space<vmem>>, vector<256x128xbf16>,
    %27 = vector.extract_strided_slice %5 {offsets = [0, 2, 7, 0], sizes = [1, 16, 16, 64], strides = [1, 1, 1, 1]} : vector<1x18x32x64xf32> to vector<1x16x16x64xf32>
    %28 = vector.shape_cast %27 : vector<1x16x16x64xf32> to vector<256x64xf32>
    %29 = vector.extract_strided_slice %5 {offsets = [0, 2, 8, 0], sizes = [1, 16, 16, 64], strides = [1, 1, 1, 1]} : vector<1x18x32x64xf32> to vector<1x16x16x64xf32>
    %30 = vector.shape_cast %29 : vector<1x16x16x64xf32> to vector<256x64xf32>
    %31 = tpu.concatenate %28, %30 in 1 : vector<256x64xf32>, vector<256x64xf32> -> vector<256x128xf32>
    %32 = arith.truncf %31 : vector<256x128xf32> to vector<256x128xbf16>
    %c0_8 = arith.constant 0 : index
    %c384 = arith.constant 384 : index
    %33 = vector.load %arg6[%c0_8, %c384] : memref<256x640xbf16, #tpu.memory_space<vmem>>, vector<256x128xbf16>
    tpu.vector_store %arg6[%c0_8, %c384], %32 {strides = array<i32>} : memref<256x640xbf16, #tpu.memory_space<vmem>>, vector<256x128xbf16>,
    %34 = vector.extract_strided_slice %5 {offsets = [0, 2, 9, 0], sizes = [1, 16, 16, 64], strides = [1, 1, 1, 1]} : vector<1x18x32x64xf32> to vector<1x16x16x64xf32>
    %35 = vector.shape_cast %34 : vector<1x16x16x64xf32> to vector<256x64xf32>
    %cst_9 = arith.constant 0.000000e+00 : f32
    %36 = vector.broadcast %cst_9 : f32 to vector<256x64xf32>
    %37 = tpu.concatenate %35, %36 in 1 : vector<256x64xf32>, vector<256x64xf32> -> vector<256x128xf32>
    %38 = arith.truncf %37 : vector<256x128xf32> to vector<256x128xbf16>
    %c0_10 = arith.constant 0 : index
    %c512 = arith.constant 512 : index
    %39 = vector.load %arg6[%c0_10, %c512] : memref<256x640xbf16, #tpu.memory_space<vmem>>, vector<256x128xbf16>
    tpu.vector_store %arg6[%c0_10, %c512], %38 {strides = array<i32>} : memref<256x640xbf16, #tpu.memory_space<vmem>>, vector<256x128xbf16>,
    %c0_11 = arith.constant 0 : index
    %c0_12 = arith.constant 0 : index
    %40 = vector.load %arg6[%c0_11, %c0_12] : memref<256x640xbf16, #tpu.memory_space<vmem>>, vector<256x640xbf16>
    %c0_13 = arith.constant 0 : index
    %c0_14 = arith.constant 0 : index
    %41 = vector.load %arg2[%c0_13, %c0_14] : memref<640x128xbf16, #tpu.memory_space<vmem>>, vector<640x128xbf16>
    %cst_15 = arith.constant dense<0.000000e+00> : vector<256x128xf32>
    %42 = tpu.matmul %40, %41, %cst_15 {dimension_numbers = #tpu.dot_dimension_numbers<[1], [0], [0], [1], [0, 0, 1, 1], [], []>} : vector<256x640xbf16>, vector<640x128xbf16>, vector<256x128xf32> -> vector<256x128xf32>
    %c0_16 = arith.constant 0 : index
    %c0_17 = arith.constant 0 : index
    %43 = vector.load %arg3[%c0_16, %c0_17] : memref<1x128xf32, #tpu.memory_space<vmem>>, vector<1x128xf32>
    %44 = vector.broadcast %43 : vector<1x128xf32> to vector<256x128xf32>
    %45 = arith.addf %42, %44 : vector<256x128xf32>
    %cst_18 = arith.constant 0.000000e+00 : f32
    %46 = vector.broadcast %cst_18 : f32 to vector<256x128xf32>
    %47 = arith.maximumf %45, %46 : vector<256x128xf32>
    %48 = arith.truncf %47 : vector<256x128xf32> to vector<256x128xbf16>
    %c0_19 = arith.constant 0 : index
    %c0_20 = arith.constant 0 : index
    %49 = vector.load %arg4[%c0_19, %c0_20] : memref<128x128xbf16, #tpu.memory_space<vmem>>, vector<128x128xbf16>
    %cst_21 = arith.constant dense<0.000000e+00> : vector<256x128xf32>
    %50 = tpu.matmul %48, %49, %cst_21 {dimension_numbers = #tpu.dot_dimension_numbers<[1], [0], [0], [1], [0, 0, 1, 1], [], []>} : vector<256x128xbf16>, vector<128x128xbf16>, vector<256x128xf32> -> vector<256x128xf32>
    %51 = arith.truncf %50 : vector<256x128xf32> to vector<256x128xbf16>
    %c0_22 = arith.constant 0 : index
    %c0_23 = arith.constant 0 : index
    %52 = vector.load %arg5[%c0_22, %c0_23] : memref<256x128xbf16, #tpu.memory_space<vmem>>, vector<256x128xbf16>
    tpu.vector_store %arg5[%c0_22, %c0_23], %51 {strides = array<i32>} : memref<256x128xbf16, #tpu.memory_space<vmem>>, vector<256x128xbf16>,
    return
  }
  func.func @transform_0(%arg0: i32) -> (i32, i32, i32, i32) {
    %c0_i32 = arith.constant 0 : i32
    %c0_i32_0 = arith.constant 0 : i32
    %c0_i32_1 = arith.constant 0 : i32
    %c0_i32_2 = arith.constant 0 : i32
    return %arg0, %c0_i32, %c0_i32_0, %c0_i32_1 : i32, i32, i32, i32
  }
  func.func @transform_1(%arg0: i32) -> (i32, i32) {
    %c0_i32 = arith.constant 0 : i32
    %c0_i32_0 = arith.constant 0 : i32
    %c0_i32_1 = arith.constant 0 : i32
    return %c0_i32, %c0_i32_0 : i32, i32
  }
  func.func @transform_2(%arg0: i32) -> (i32, i32) {
    %c0_i32 = arith.constant 0 : i32
    %c0_i32_0 = arith.constant 0 : i32
    %c0_i32_1 = arith.constant 0 : i32
    return %c0_i32, %c0_i32_0 : i32, i32
  }
  func.func @transform_3(%arg0: i32) -> (i32, i32) {
    %c0_i32 = arith.constant 0 : i32
    %c0_i32_0 = arith.constant 0 : i32
    %c0_i32_1 = arith.constant 0 : i32
    return %c0_i32, %c0_i32_0 : i32, i32
  }
  func.func @transform_4(%arg0: i32) -> (i32, i32) {
    %c0_i32 = arith.constant 0 : i32
    %c0_i32_0 = arith.constant 0 : i32
    return %arg0, %c0_i32 : i32, i32
  }
}

</mosaic_0001>

<llo_original>
// kernel: seg_head_forward.1
$region0: #{seg_head_forward.1}
  #allocation0 [shape = 'u32[]', space=smem, size = 0x4, offset = 0x4, fixed_abs, tag = 'smem constant byte address 0x4 - core index']
  #allocation1 [shape = 'u32[72,128]{1,0:T(1,128)}', space=vmem, size = 0x9000, scoped, tag = 'internal scratch']
  #allocation2 [shape = 'bf16[256,640]{1,0:T(8,128)(2,1)}', space=vmem, size = 0x50000, scoped, tag = 'scratch operand']
  %s0 = inlined_call_operand.vmem [shape: bf16[2,16,16,64], index: 0, kind: input, shape index: {}]
  %s1 = inlined_call_operand.vmem [shape: bf16[640,128], index: 1, kind: input, shape index: {}]
  %s2 = inlined_call_operand.vmem [shape: f32[1,128], index: 2, kind: input, shape index: {}]
  %s3 = inlined_call_operand.vmem [shape: bf16[128,128], index: 3, kind: input, shape index: {}]
  %s4 = inlined_call_operand.vmem [shape: bf16[512,128], index: 4, kind: output, shape index: {}]
  %s5 = sld [smem:[#allocation0]]
  $region49: #{seg_head_forward.1} parent=0
    _
  %s7 = ssub.s32 1, %s5
  %s8 = scalar_select 0, %s7, %s5
  loop: start=0, step=1, limit=4
  $region2: #{seg_head_forward.1} parent=0 // loop_pre_header
    _
  $region3: #{seg_head_forward.1} parent=0 // loop_header
    %s10 = sphi 0, %s14
    %p11 = scmp.ge.s32.totalorder %s10, 4
    %s20 = sphi 0, %s22
    %s23 = sphi 0, %s20
    %s24 = sphi 0, %s23
    %s40 = sphi 0, %s24
    %s44 = sphi 0, %s44
    %s46 = sphi 0, %s44
    %s47 = sphi 0, %s46
    %s61 = sphi 0, %s47
    %s65 = sphi 0, %s65
    %s67 = sphi 0, %s65
    %s68 = sphi 0, %s67
    %s82 = sphi 0, %s68
    %s86 = sphi 0, %s86
    %s88 = sphi 0, %s86
    %s89 = sphi 0, %s88
    %s103 = sphi 0, %s89
    %s109 = sphi 0, %s111
    %s112 = sphi 0, %s109
    %s113 = sphi 0, %s112
    %s129 = sphi 0, %s113
  $region4: #{seg_head_forward.1} parent=0 // loop_header_branch
    %13 = sbr.rel (%p11) target = $region8
  $region5: #{seg_head_forward.1} parent=0 // loop_body
    %s15 = ssub.s32 %s10, 1
    %s16 = ssub.s32 %s10, 2
    %s17 = sadd.s32 %s10, 1
    %s18 = ssub.s32 %s10, %s17
    %p19 = scmp.eq.s32.totalorder %s18, 0
    %s21 = sadd.s32 %s20, 1
    %s22 = scalar_select %p19, %s20, %s21
    %p25 = pneg %p19
    %p26 = scmp.eq.s32.totalorder %s10, 1
    %p27 = por %p25, %p26
    %p28 = scmp.ne.s32.totalorder %s20, %s23
    %p29 = scmp.eq.s32.totalorder %s10, 0
    %p30 = por %p28, %p29
    %p31 = scmp.ne.s32.totalorder %s20, %s23
    %p32 = scmp.eq.s32.totalorder %s15, 1
    %p33 = por %p31, %p32
    %p34 = scmp.ne.s32.totalorder %s23, %s24
    %p35 = scmp.eq.s32.totalorder %s15, 0
    %p36 = por %p34, %p35
    %p37 = scmp.ne.s32.totalorder %s23, %s24
    %p38 = scmp.eq.s32.totalorder %s16, 1
    %p39 = por %p37, %p38
    %p41 = scmp.ne.s32.totalorder %s24, %s40
    %p42 = scmp.eq.s32.totalorder %s16, 0
    %p43 = por %p41, %p42
    %s45 = sadd.s32 %s44, 1
    %p48 = scmp.eq.s32.totalorder %s10, 1
    %p49 = scmp.ne.s32.totalorder %s44, %s46
    %p50 = scmp.eq.s32.totalorder %s10, 0
    %p51 = por %p49, %p50
    %p52 = scmp.ne.s32.totalorder %s44, %s46
    %p53 = scmp.eq.s32.totalorder %s15, 1
    %p54 = por %p52, %p53
    %p55 = scmp.ne.s32.totalorder %s46, %s47
    %p56 = scmp.eq.s32.totalorder %s15, 0
    %p57 = por %p55, %p56
    %p58 = scmp.ne.s32.totalorder %s46, %s47
    %p59 = scmp.eq.s32.totalorder %s16, 1
    %p60 = por %p58, %p59
    %p62 = scmp.ne.s32.totalorder %s47, %s61
    %p63 = scmp.eq.s32.totalorder %s16, 0
    %p64 = por %p62, %p63
    %s66 = sadd.s32 %s65, 1
    %p69 = scmp.eq.s32.totalorder %s10, 1
    %p70 = scmp.ne.s32.totalorder %s65, %s67
    %p71 = scmp.eq.s32.totalorder %s10, 0
    %p72 = por %p70, %p71
    %p73 = scmp.ne.s32.totalorder %s65, %s67
    %p74 = scmp.eq.s32.totalorder %s15, 1
    %p75 = por %p73, %p74
    %p76 = scmp.ne.s32.totalorder %s67, %s68
    %p77 = scmp.eq.s32.totalorder %s15, 0
    %p78 = por %p76, %p77
    %p79 = scmp.ne.s32.totalorder %s67, %s68
    %p80 = scmp.eq.s32.totalorder %s16, 1
    %p81 = por %p79, %p80
    %p83 = scmp.ne.s32.totalorder %s68, %s82
    %p84 = scmp.eq.s32.totalorder %s16, 0
    %p85 = por %p83, %p84
    %s87 = sadd.s32 %s86, 1
    %p90 = scmp.eq.s32.totalorder %s10, 1
    %p91 = scmp.ne.s32.totalorder %s86, %s88
    %p92 = scmp.eq.s32.totalorder %s10, 0
    %p93 = por %p91, %p92
    %p94 = scmp.ne.s32.totalorder %s86, %s88
    %p95 = scmp.eq.s32.totalorder %s15, 1
    %p96 = por %p94, %p95
    %p97 = scmp.ne.s32.totalorder %s88, %s89
    %p98 = scmp.eq.s32.totalorder %s15, 0
    %p99 = por %p97, %p98
    %p100 = scmp.ne.s32.totalorder %s88, %s89
    %p101 = scmp.eq.s32.totalorder %s16, 1
    %p102 = por %p100, %p101
    %p104 = scmp.ne.s32.totalorder %s89, %s103
    %p105 = scmp.eq.s32.totalorder %s16, 0
    %p106 = por %p104, %p105
    %s107 = ssub.s32 %s10, %s17
    %p108 = scmp.eq.s32.totalorder %s107, 0
    %s110 = sadd.s32 %s109, 1
    %s111 = scalar_select %p108, %s109, %s110
    %p114 = pneg %p108
    %p115 = scmp.eq.s32.totalorder %s10, 1
    %p116 = por %p114, %p115
    %p117 = scmp.ne.s32.totalorder %s109, %s112
    %p118 = scmp.eq.s32.totalorder %s10, 0
    %p119 = por %p117, %p118
    %p120 = scmp.ne.s32.totalorder %s109, %s112
    %p121 = scmp.eq.s32.totalorder %s15, 1
    %p122 = por %p120, %p121
    %p123 = scmp.ne.s32.totalorder %s112, %s113
    %p124 = scmp.eq.s32.totalorder %s15, 0
    %p125 = por %p123, %p124
    %p126 = scmp.ne.s32.totalorder %s112, %s113
    %p127 = scmp.eq.s32.totalorder %s16, 1
    %p128 = por %p126, %p127
    %p130 = scmp.ne.s32.totalorder %s113, %s129
    %p131 = scmp.eq.s32.totalorder %s16, 0
    %p132 = por %p130, %p131
    %p133 = scmp.le.s32.totalorder 1, %s10
    %p134 = scmp.lt.s32.totalorder %s10, 3
    %p135 = pnand %p133, %p134
    %p136 = pneg %p135
    // Predicated region
    $region9: #{seg_head_forward.1} parent=5 // pred_check
      _
    $region10: #{seg_head_forward.1} parent=5 // pred_check_branch
      %138 = sbr.rel (%p135) target = $region12
    $region11: #{seg_head_forward.1} parent=5 // pred_region
      %s139 = ssub.s32 %s10, 1
      // Predicated region
      $region13: #{seg_head_forward.1} parent=11 // pred_check
        %p140 = pneg %p57
      $region14: #{seg_head_forward.1} parent=11 // pred_check_branch
        %142 = sbr.rel (%p140) target = $region16
      $region15: #{seg_head_forward.1} parent=11 // pred_region
        _
      $region16: #{seg_head_forward.1} parent=11 // pred_fallthru
        _
      // Predicated region
      $region17: #{seg_head_forward.1} parent=11 // pred_check
        %p143 = pneg %p78
      $region18: #{seg_head_forward.1} parent=11 // pred_check_branch
        %145 = sbr.rel (%p143) target = $region20
      $region19: #{seg_head_forward.1} parent=11 // pred_region
        _
      $region20: #{seg_head_forward.1} parent=11 // pred_fallthru
        _
      // Predicated region
      $region21: #{seg_head_forward.1} parent=11 // pred_check
        %p146 = pneg %p99
      $region22: #{seg_head_forward.1} parent=11 // pred_check_branch
        %148 = sbr.rel (%p146) target = $region24
      $region23: #{seg_head_forward.1} parent=11 // pred_region
        _
      $region24: #{seg_head_forward.1} parent=11 // pred_fallthru
        _
    $region12: #{seg_head_forward.1} parent=5 // pred_fallthru
      _
    %p149 = scmp.lt.s32.totalorder %s10, 2
    // Predicated region
    $region25: #{seg_head_forward.1} parent=5 // pred_check
      %p150 = pneg %p149
    $region26: #{seg_head_forward.1} parent=5 // pred_check_branch
      %152 = sbr.rel (%p150) target = $region28
    $region27: #{seg_head_forward.1} parent=5 // pred_region
      // Predicated region
      $region29: #{seg_head_forward.1} parent=27 // pred_check
        %p153 = pneg %p30
      $region30: #{seg_head_forward.1} parent=27 // pred_check_branch
        %155 = sbr.rel (%p153) target = $region32
      $region31: #{seg_head_forward.1} parent=27 // pred_region
        %p156 = scmp.lt.s32.totalorder %s10, 1
        %s157 = scalar_select %p156, %s10, 1
        %s158 = smul.addr %s157, 32
        %s159 = smul.addr %s158, 4
        %s160 = scalar_lea.vmem %s0, %s159
      $region32: #{seg_head_forward.1} parent=27 // pred_fallthru
        _
    $region28: #{seg_head_forward.1} parent=5 // pred_fallthru
      _
    %p161 = scmp.le.s32.totalorder 1, %s10
    %p162 = scmp.lt.s32.totalorder %s10, 3
    %p163 = pnand %p161, %p162
    %p164 = pneg %p163
    // Predicated region
    $region33: #{seg_head_forward.1} parent=5 // pred_check
      _
    $region34: #{seg_head_forward.1} parent=5 // pred_check_branch
      %166 = sbr.rel (%p163) target = $region36
    $region35: #{seg_head_forward.1} parent=5 // pred_region
      %s167 = ssub.s32 %s10, 1
      %p168 = scmp.lt.s32.totalorder %s15, 1
      %s169 = scalar_select %p168, %s15, 1
      %s170 = smul.addr %s169, 32
      %s171 = smul.addr %s170, 4
      %s172 = scalar_lea.vmem %s0, %s171
      %p173 = pneg %p36
      %p174 = pneg %p33
      %p175 = pneg %p57
      %p176 = pneg %p54
      %p177 = pneg %p78
      %p178 = pneg %p75
      %p179 = pneg %p99
      %p180 = pneg %p96
      %p181 = pneg %p125
      %p182 = pneg %p122
      %s183 = smul.u32 32, %s15
      %p184 = scmp.lt.s32.totalorder %s183, 63
      %s185 = scalar_select %p184, %s183, 63
      %s186 = smul.addr %s185, 4
      %s187 = scalar_lea.vmem %s4, %s186
      %p188 = scmp.lt.s32.totalorder %s15, 1
      %s189 = scalar_select %p188, %s15, 1
      %s190 = smul.addr %s189, 32
      %s191 = smul.addr %s190, 4
      %s192 = scalar_lea.vmem %s0, %s191
      %s193 = smul.u32 32, %s15
      %p194 = scmp.lt.s32.totalorder %s193, 63
      %s195 = scalar_select %p194, %s193, 63
      %s196 = smul.addr %s195, 4
      %s197 = scalar_lea.vmem %s4, %s196
      %s198 = smul.u32 32, %s15
      %v199 = vld [vmem:[%s192] sm:$0xf]
      %v200 = vld [vmem:[%s192 + $0x4] sm:$0xf]
      %v201 = vld [vmem:[%s192 + $0x8] sm:$0xf]
      %v202 = vld [vmem:[%s192 + $0xc] sm:$0xf]
      %v203 = vld [vmem:[%s192 + $0x10] sm:$0xf]
      %v204 = vld [vmem:[%s192 + $0x14] sm:$0xf]
      %v205 = vld [vmem:[%s192 + $0x18] sm:$0xf]
      %v206 = vld [vmem:[%s192 + $0x1c] sm:$0xf]
      %v207 = vld [vmem:[%s192 + $0x20] sm:$0xf]
      %v208 = vld [vmem:[%s192 + $0x24] sm:$0xf]
      %v209 = vld [vmem:[%s192 + $0x28] sm:$0xf]
      %v210 = vld [vmem:[%s192 + $0x2c] sm:$0xf]
      %v211 = vld [vmem:[%s192 + $0x30] sm:$0xf]
      %v212 = vld [vmem:[%s192 + $0x34] sm:$0xf]
      %v213 = vld [vmem:[%s192 + $0x38] sm:$0xf]
      %v214 = vld [vmem:[%s192 + $0x3c] sm:$0xf]
      %v215 = vld [vmem:[%s192 + $0x40] sm:$0xf]
      %v216 = vld [vmem:[%s192 + $0x44] sm:$0xf]
      %v217 = vld [vmem:[%s192 + $0x48] sm:$0xf]
      %v218 = vld [vmem:[%s192 + $0x4c] sm:$0xf]
      %v219 = vld [vmem:[%s192 + $0x50] sm:$0xf]
      %v220 = vld [vmem:[%s192 + $0x54] sm:$0xf]
      %v221 = vld [vmem:[%s192 + $0x58] sm:$0xf]
      %v222 = vld [vmem:[%s192 + $0x5c] sm:$0xf]
      %v223 = vld [vmem:[%s192 + $0x60] sm:$0xf]
      %v224 = vld [vmem:[%s192 + $0x64] sm:$0xf]
      %v225 = vld [vmem:[%s192 + $0x68] sm:$0xf]
      %v226 = vld [vmem:[%s192 + $0x6c] sm:$0xf]
      %v227 = vld [vmem:[%s192 + $0x70] sm:$0xf]
      %v228 = vld [vmem:[%s192 + $0x74] sm:$0xf]
      %v229 = vld [vmem:[%s192 + $0x78] sm:$0xf]
      %v230 = vld [vmem:[%s192 + $0x7c] sm:$0xf]
      %v231 = vunpack.c.l.bf16 %v199
      %v232 = vunpack.c.l.bf16 %v200
      %v233 = vunpack.c.l.bf16 %v201
      %v234 = vunpack.c.l.bf16 %v202
      %v235 = vunpack.c.l.bf16 %v203
      %v236 = vunpack.c.l.bf16 %v204
      %v237 = vunpack.c.l.bf16 %v205
      %v238 = vunpack.c.l.bf16 %v206
      %v239 = vunpack.c.l.bf16 %v207
      %v240 = vunpack.c.l.bf16 %v208
      %v241 = vunpack.c.l.bf16 %v209
      %v242 = vunpack.c.l.bf16 %v210
      %v243 = vunpack.c.l.bf16 %v211
      %v244 = vunpack.c.l.bf16 %v212
      %v245 = vunpack.c.l.bf16 %v213
      %v246 = vunpack.c.l.bf16 %v214
      %v247 = vunpack.c.l.bf16 %v215
      %v248 = vunpack.c.l.bf16 %v216
      %v249 = vunpack.c.l.bf16 %v217
      %v250 = vunpack.c.l.bf16 %v218
      %v251 = vunpack.c.l.bf16 %v219
      %v252 = vunpack.c.l.bf16 %v220
      %v253 = vunpack.c.l.bf16 %v221
      %v254 = vunpack.c.l.bf16 %v222
      %v255 = vunpack.c.l.bf16 %v223
      %v256 = vunpack.c.l.bf16 %v224
      %v257 = vunpack.c.l.bf16 %v225
      %v258 = vunpack.c.l.bf16 %v226
      %v259 = vunpack.c.l.bf16 %v227
      %v260 = vunpack.c.l.bf16 %v228
      %v261 = vunpack.c.l.bf16 %v229
      %v262 = vunpack.c.l.bf16 %v230
      %vm294 = vcmask 1040384
      %v295 = vrot.slane 0.0, 7
      %v296 = vsel %vm294, %v295, %v295
      %v297 = vrot.slane %v231, 7
      %v298 = vsel %vm294, %v295, %v297
      %v299 = vrot.slane %v232, 7
      %v300 = vsel %vm294, %v297, %v299
      %v301 = vrot.slane %v233, 7
      %v302 = vsel %vm294, %v295, %v301
      %v303 = vrot.slane %v234, 7
      %v304 = vsel %vm294, %v301, %v303
      %v305 = vrot.slane %v235, 7
      %v306 = vsel %vm294, %v295, %v305
      %v307 = vrot.slane %v236, 7
      %v308 = vsel %vm294, %v305, %v307
      %v309 = vrot.slane %v237, 7
      %v310 = vsel %vm294, %v295, %v309
      %v311 = vrot.slane %v238, 7
      %v312 = vsel %vm294, %v309, %v311
      %v313 = vrot.slane %v239, 7
      %v314 = vsel %vm294, %v295, %v313
      %v315 = vrot.slane %v240, 7
      %v316 = vsel %vm294, %v313, %v315
      %v317 = vrot.slane %v241, 7
      %v318 = vsel %vm294, %v295, %v317
      %v319 = vrot.slane %v242, 7
      %v320 = vsel %vm294, %v317, %v319
      %v321 = vrot.slane %v243, 7
      %v322 = vsel %vm294, %v295, %v321
      %v323 = vrot.slane %v244, 7
      %v324 = vsel %vm294, %v321, %v323
      %v325 = vrot.slane %v245, 7
      %v326 = vsel %vm294, %v295, %v325
      %v327 = vrot.slane %v246, 7
      %v328 = vsel %vm294, %v325, %v327
      %v329 = vrot.slane %v247, 7
      %v330 = vsel %vm294, %v295, %v329
      %v331 = vrot.slane %v248, 7
      %v332 = vsel %vm294, %v329, %v331
      %v333 = vrot.slane %v249, 7
      %v334 = vsel %vm294, %v295, %v333
      %v335 = vrot.slane %v250, 7
      %v336 = vsel %vm294, %v333, %v335
      %v337 = vrot.slane %v251, 7
      %v338 = vsel %vm294, %v295, %v337
      %v339 = vrot.slane %v252, 7
      %v340 = vsel %vm294, %v337, %v339
      %v341 = vrot.slane %v253, 7
      %v342 = vsel %vm294, %v295, %v341
      %v343 = vrot.slane %v254, 7
      %v344 = vsel %vm294, %v341, %v343
      %v345 = vrot.slane %v255, 7
      %v346 = vsel %vm294, %v295, %v345
      %v347 = vrot.slane %v256, 7
      %v348 = vsel %vm294, %v345, %v347
      %v349 = vrot.slane %v257, 7
      %v350 = vsel %vm294, %v295, %v349
      %v351 = vrot.slane %v258, 7
      %v352 = vsel %vm294, %v349, %v351
      %v353 = vrot.slane %v259, 7
      %v354 = vsel %vm294, %v295, %v353
      %v355 = vrot.slane %v260, 7
      %v356 = vsel %vm294, %v353, %v355
      %388 = vrot.lane.b32.xlu0 0.0, 64
      %v389 = vpop.permute.xlu0 %388
      %390 = vrot.lane.b32.xlu0 %v231, 64
      %v391 = vpop.permute.xlu0 %390
      %392 = vrot.lane.b32.xlu0 %v232, 64
      %v393 = vpop.permute.xlu0 %392
      %394 = vrot.lane.b32.xlu0 %v233, 64
      %v395 = vpop.permute.xlu0 %394
      %396 = vrot.lane.b32.xlu0 %v234, 64
      %v397 = vpop.permute.xlu0 %396
      %398 = vrot.lane.b32.xlu0 %v235, 64
      %v399 = vpop.permute.xlu0 %398
      %400 = vrot.lane.b32.xlu0 %v236, 64
      %v401 = vpop.permute.xlu0 %400
      %402 = vrot.lane.b32.xlu0 %v237, 64
      %v403 = vpop.permute.xlu0 %402
      %404 = vrot.lane.b32.xlu0 %v238, 64
      %v405 = vpop.permute.xlu0 %404
      %406 = vrot.lane.b32.xlu0 %v239, 64
      %v407 = vpop.permute.xlu0 %406
      %408 = vrot.lane.b32.xlu0 %v240, 64
      %v409 = vpop.permute.xlu0 %408
      %410 = vrot.lane.b32.xlu0 %v241, 64
      %v411 = vpop.permute.xlu0 %410
      %412 = vrot.lane.b32.xlu0 %v242, 64
      %v413 = vpop.permute.xlu0 %412
      %414 = vrot.lane.b32.xlu0 %v243, 64
      %v415 = vpop.permute.xlu0 %414
      %416 = vrot.lane.b32.xlu0 %v244, 64
      %v417 = vpop.permute.xlu0 %416
      %418 = vrot.lane.b32.xlu0 %v245, 64
      %v419 = vpop.permute.xlu0 %418
      %420 = vrot.lane.b32.xlu0 %v246, 64
      %v421 = vpop.permute.xlu0 %420
      %422 = vrot.lane.b32.xlu0 %v247, 64
      %v423 = vpop.permute.xlu0 %422
      %424 = vrot.lane.b32.xlu0 %v248, 64
      %v425 = vpop.permute.xlu0 %424
      %426 = vrot.lane.b32.xlu0 %v249, 64
      %v427 = vpop.permute.xlu0 %426
      %428 = vrot.lane.b32.xlu0 %v250, 64
      %v429 = vpop.permute.xlu0 %428
      %430 = vrot.lane.b32.xlu0 %v251, 64
      %v431 = vpop.permute.xlu0 %430
      %432 = vrot.lane.b32.xlu0 %v252, 64
      %v433 = vpop.permute.xlu0 %432
      %434 = vrot.lane.b32.xlu0 %v253, 64
      %v435 = vpop.permute.xlu0 %434
      %436 = vrot.lane.b32.xlu0 %v254, 64
      %v437 = vpop.permute.xlu0 %436
      %438 = vrot.lane.b32.xlu0 %v255, 64
      %v439 = vpop.permute.xlu0 %438
      %440 = vrot.lane.b32.xlu0 %v256, 64
      %v441 = vpop.permute.xlu0 %440
      %442 = vrot.lane.b32.xlu0 %v257, 64
      %v443 = vpop.permute.xlu0 %442
      %444 = vrot.lane.b32.xlu0 %v258, 64
      %v445 = vpop.permute.xlu0 %444
      %446 = vrot.lane.b32.xlu0 %v259, 64
      %v447 = vpop.permute.xlu0 %446
      %448 = vrot.lane.b32.xlu0 %v260, 64
      %v449 = vpop.permute.xlu0 %448
      %vm481 = vcmask 523264
      %v482 = vsel %vm481, %v296, %v389
      %v483 = vsel %vm481, %v298, %v391
      %v484 = vsel %vm481, %v300, %v393
      %v485 = vsel %vm481, %v302, %v395
      %v486 = vsel %vm481, %v304, %v397
      %v487 = vsel %vm481, %v306, %v399
      %v488 = vsel %vm481, %v308, %v401
      %v489 = vsel %vm481, %v310, %v403
      %v490 = vsel %vm481, %v312, %v405
      %v491 = vsel %vm481, %v314, %v407
      %v492 = vsel %vm481, %v316, %v409
      %v493 = vsel %vm481, %v318, %v411
      %v494 = vsel %vm481, %v320, %v413
      %v495 = vsel %vm481, %v322, %v415
      %v496 = vsel %vm481, %v324, %v417
      %v497 = vsel %vm481, %v326, %v419
      %v498 = vsel %vm481, %v328, %v421
      %v499 = vsel %vm481, %v330, %v423
      %v500 = vsel %vm481, %v332, %v425
      %v501 = vsel %vm481, %v334, %v427
      %v502 = vsel %vm481, %v336, %v429
      %v503 = vsel %vm481, %v338, %v431
      %v504 = vsel %vm481, %v340, %v433
      %v505 = vsel %vm481, %v342, %v435
      %v506 = vsel %vm481, %v344, %v437
      %v507 = vsel %vm481, %v346, %v439
      %v508 = vsel %vm481, %v348, %v441
      %v509 = vsel %vm481, %v350, %v443
      %v510 = vsel %vm481, %v352, %v445
      %v511 = vsel %vm481, %v354, %v447
      %v512 = vsel %vm481, %v356, %v449
      %v513 = vpack.c.bf16 %v482, %v482
      %v514 = vpack.c.bf16 %v483, %v483
      %v515 = vpack.c.bf16 %v484, %v484
      %v516 = vpack.c.bf16 %v485, %v485
      %v517 = vpack.c.bf16 %v486, %v486
      %v518 = vpack.c.bf16 %v487, %v487
      %v519 = vpack.c.bf16 %v488, %v488
      %v520 = vpack.c.bf16 %v489, %v489
      %v521 = vpack.c.bf16 %v490, %v490
      %v522 = vpack.c.bf16 %v491, %v491
      %v523 = vpack.c.bf16 %v492, %v492
      %v524 = vpack.c.bf16 %v493, %v493
      %v525 = vpack.c.bf16 %v494, %v494
      %v526 = vpack.c.bf16 %v495, %v495
      %v527 = vpack.c.bf16 %v496, %v496
      %v528 = vpack.c.bf16 %v497, %v497
      %v529 = vpack.c.bf16 %v498, %v498
      %v530 = vpack.c.bf16 %v499, %v499
      %v531 = vpack.c.bf16 %v500, %v500
      %v532 = vpack.c.bf16 %v501, %v501
      %v533 = vpack.c.bf16 %v502, %v502
      %v534 = vpack.c.bf16 %v503, %v503
      %v535 = vpack.c.bf16 %v504, %v504
      %v536 = vpack.c.bf16 %v505, %v505
      %v537 = vpack.c.bf16 %v506, %v506
      %v538 = vpack.c.bf16 %v507, %v507
      %v539 = vpack.c.bf16 %v508, %v508
      %v540 = vpack.c.bf16 %v509, %v509
      %v541 = vpack.c.bf16 %v510, %v510
      %v542 = vpack.c.bf16 %v511, %v511
      %v543 = vpack.c.bf16 %v512, %v512
      %544 = vst [vmem:[#allocation2] sm:$0xf] %v513
      %545 = vst [vmem:[#allocation2 + $0x14] sm:$0xf] %v513
      %546 = vst [vmem:[#allocation2 + $0x28] sm:$0xf] %v514
      %547 = vst [vmem:[#allocation2 + $0x3c] sm:$0xf] %v515
      %548 = vst [vmem:[#allocation2 + $0x50] sm:$0xf] %v516
      %549 = vst [vmem:[#allocation2 + $0x64] sm:$0xf] %v517
      %550 = vst [vmem:[#allocation2 + $0x78] sm:$0xf] %v518
      %551 = vst [vmem:[#allocation2 + $0x8c] sm:$0xf] %v519
      %552 = vst [vmem:[#allocation2 + $0xa0] sm:$0xf] %v520
      %553 = vst [vmem:[#allocation2 + $0xb4] sm:$0xf] %v521
      %554 = vst [vmem:[#allocation2 + $0xc8] sm:$0xf] %v522
      %555 = vst [vmem:[#allocation2 + $0xdc] sm:$0xf] %v523
      %556 = vst [vmem:[#allocation2 + $0xf0] sm:$0xf] %v524
      %557 = vst [vmem:[#allocation2 + $0x104] sm:$0xf] %v525
      %558 = vst [vmem:[#allocation2 + $0x118] sm:$0xf] %v526
      %559 = vst [vmem:[#allocation2 + $0x12c] sm:$0xf] %v527
      %560 = vst [vmem:[#allocation2 + $0x140] sm:$0xf] %v528
      %561 = vst [vmem:[#allocation2 + $0x154] sm:$0xf] %v529
      %562 = vst [vmem:[#allocation2 + $0x168] sm:$0xf] %v530
      %563 = vst [vmem:[#allocation2 + $0x17c] sm:$0xf] %v531
      %564 = vst [vmem:[#allocation2 + $0x190] sm:$0xf] %v532
      %565 = vst [vmem:[#allocation2 + $0x1a4] sm:$0xf] %v533
      %566 = vst [vmem:[#allocation2 + $0x1b8] sm:$0xf] %v534
      %567 = vst [vmem:[#allocation2 + $0x1cc] sm:$0xf] %v535
      %568 = vst [vmem:[#allocation2 + $0x1e0] sm:$0xf] %v536
      %569 = vst [vmem:[#allocation2 + $0x1f4] sm:$0xf] %v537
      %570 = vst [vmem:[#allocation2 + $0x208] sm:$0xf] %v538
      %571 = vst [vmem:[#allocation2 + $0x21c] sm:$0xf] %v539
      %572 = vst [vmem:[#allocation2 + $0x230] sm:$0xf] %v540
      %573 = vst [vmem:[#allocation2 + $0x244] sm:$0xf] %v541
      %574 = vst [vmem:[#allocation2 + $0x258] sm:$0xf] %v542
      %575 = vst [vmem:[#allocation2 + $0x26c] sm:$0xf] %v543
      %vm576 = vcmask 1046528
      %v577 = vrot.slane 0.0, 1
      %v578 = vsel %vm576, %v577, %v577
      %v579 = vrot.slane %v231, 1
      %v580 = vrot.slane %v232, 1
      %v581 = vsel %vm576, %v579, %v580
      %v582 = vsel %vm576, %v580, %v577
      %v583 = vrot.slane %v233, 1
      %v584 = vrot.slane %v234, 1
      %v585 = vsel %vm576, %v583, %v584
      %v586 = vsel %vm576, %v584, %v577
      %v587 = vrot.slane %v235, 1
      %v588 = vrot.slane %v236, 1
      %v589 = vsel %vm576, %v587, %v588
      %v590 = vsel %vm576, %v588, %v577
      %v591 = vrot.slane %v237, 1
      %v592 = vrot.slane %v238, 1
      %v593 = vsel %vm576, %v591, %v592
      %v594 = vsel %vm576, %v592, %v577
      %v595 = vrot.slane %v239, 1
      %v596 = vrot.slane %v240, 1
      %v597 = vsel %vm576, %v595, %v596
      %v598 = vsel %vm576, %v596, %v577
      %v599 = vrot.slane %v241, 1
      %v600 = vrot.slane %v242, 1
      %v601 = vsel %vm576, %v599, %v600
      %v602 = vsel %vm576, %v600, %v577
      %v603 = vrot.slane %v243, 1
      %v604 = vrot.slane %v244, 1
      %v605 = vsel %vm576, %v603, %v604
      %v606 = vsel %vm576, %v604, %v577
      %v607 = vrot.slane %v245, 1
      %v608 = vrot.slane %v246, 1
      %v609 = vsel %vm576, %v607, %v608
      %v610 = vsel %vm576, %v608, %v577
      %v611 = vrot.slane %v247, 1
      %v612 = vrot.slane %v248, 1
      %v613 = vsel %vm576, %v611, %v612
      %v614 = vsel %vm576, %v612, %v577
      %v615 = vrot.slane %v249, 1
      %v616 = vrot.slane %v250, 1
      %v617 = vsel %vm576, %v615, %v616
      %v618 = vsel %vm576, %v616, %v577
      %v619 = vrot.slane %v251, 1
      %v620 = vrot.slane %v252, 1
      %v621 = vsel %vm576, %v619, %v620
      %v622 = vsel %vm576, %v620, %v577
      %v623 = vrot.slane %v253, 1
      %v624 = vrot.slane %v254, 1
      %v625 = vsel %vm576, %v623, %v624
      %v626 = vsel %vm576, %v624, %v577
      %v627 = vrot.slane %v255, 1
      %v628 = vrot.slane %v256, 1
      %v629 = vsel %vm576, %v627, %v628
      %v630 = vsel %vm576, %v628, %v577
      %v631 = vrot.slane %v257, 1
      %v632 = vrot.slane %v258, 1
      %v633 = vsel %vm576, %v631, %v632
      %v634 = vsel %vm576, %v632, %v577
      %v635 = vrot.slane %v259, 1
      %v636 = vrot.slane %v260, 1
      %v637 = vsel %vm576, %v635, %v636
      %v638 = vsel %vm576, %v636, %v577
      %v672 = vrot.slane %v261, 7
      %v673 = vsel %vm294, %v295, %v672
      %v674 = vrot.slane %v262, 7
      %v675 = vsel %vm294, %v672, %v674
      %676 = vrot.lane.b32.xlu0 %v298, 64
      %v677 = vpop.permute.xlu0 %676
      %678 = vrot.lane.b32.xlu0 %v300, 64
      %v679 = vpop.permute.xlu0 %678
      %680 = vrot.lane.b32.xlu0 %v302, 64
      %v681 = vpop.permute.xlu0 %680
      %682 = vrot.lane.b32.xlu0 %v304, 64
      %v683 = vpop.permute.xlu0 %682
      %684 = vrot.lane.b32.xlu0 %v306, 64
      %v685 = vpop.permute.xlu0 %684
      %686 = vrot.lane.b32.xlu0 %v308, 64
      %v687 = vpop.permute.xlu0 %686
      %688 = vrot.lane.b32.xlu0 %v310, 64
      %v689 = vpop.permute.xlu0 %688
      %690 = vrot.lane.b32.xlu0 %v312, 64
      %v691 = vpop.permute.xlu0 %690
      %692 = vrot.lane.b32.xlu0 %v314, 64
      %v693 = vpop.permute.xlu0 %692
      %694 = vrot.lane.b32.xlu0 %v316, 64
      %v695 = vpop.permute.xlu0 %694
      %696 = vrot.lane.b32.xlu0 %v318, 64
      %v697 = vpop.permute.xlu0 %696
      %698 = vrot.lane.b32.xlu0 %v320, 64
      %v699 = vpop.permute.xlu0 %698
      %700 = vrot.lane.b32.xlu0 %v322, 64
      %v701 = vpop.permute.xlu0 %700
      %702 = vrot.lane.b32.xlu0 %v324, 64
      %v703 = vpop.permute.xlu0 %702
      %704 = vrot.lane.b32.xlu0 %v326, 64
      %v705 = vpop.permute.xlu0 %704
      %706 = vrot.lane.b32.xlu0 %v328, 64
      %v707 = vpop.permute.xlu0 %706
      %708 = vrot.lane.b32.xlu0 %v330, 64
      %v709 = vpop.permute.xlu0 %708
      %710 = vrot.lane.b32.xlu0 %v332, 64
      %v711 = vpop.permute.xlu0 %710
      %712 = vrot.lane.b32.xlu0 %v334, 64
      %v713 = vpop.permute.xlu0 %712
      %714 = vrot.lane.b32.xlu0 %v336, 64
      %v715 = vpop.permute.xlu0 %714
      %716 = vrot.lane.b32.xlu0 %v338, 64
      %v717 = vpop.permute.xlu0 %716
      %718 = vrot.lane.b32.xlu0 %v340, 64
      %v719 = vpop.permute.xlu0 %718
      %720 = vrot.lane.b32.xlu0 %v342, 64
      %v721 = vpop.permute.xlu0 %720
      %722 = vrot.lane.b32.xlu0 %v344, 64
      %v723 = vpop.permute.xlu0 %722
      %724 = vrot.lane.b32.xlu0 %v346, 64
      %v725 = vpop.permute.xlu0 %724
      %726 = vrot.lane.b32.xlu0 %v348, 64
      %v727 = vpop.permute.xlu0 %726
      %728 = vrot.lane.b32.xlu0 %v350, 64
      %v729 = vpop.permute.xlu0 %728
      %730 = vrot.lane.b32.xlu0 %v352, 64
      %v731 = vpop.permute.xlu0 %730
      %732 = vrot.lane.b32.xlu0 %v354, 64
      %v733 = vpop.permute.xlu0 %732
      %734 = vrot.lane.b32.xlu0 %v356, 64
      %v735 = vpop.permute.xlu0 %734
      %736 = vrot.lane.b32.xlu0 %v673, 64
      %v737 = vpop.permute.xlu0 %736
      %738 = vrot.lane.b32.xlu0 %v675, 64
      %v739 = vpop.permute.xlu0 %738
      %v772 = vsel %vm481, %v578, %v677
      %v773 = vsel %vm481, %v578, %v679
      %v774 = vsel %vm481, %v581, %v681
      %v775 = vsel %vm481, %v582, %v683
      %v776 = vsel %vm481, %v585, %v685
      %v777 = vsel %vm481, %v586, %v687
      %v778 = vsel %vm481, %v589, %v689
      %v779 = vsel %vm481, %v590, %v691
      %v780 = vsel %vm481, %v593, %v693
      %v781 = vsel %vm481, %v594, %v695
      %v782 = vsel %vm481, %v597, %v697
      %v783 = vsel %vm481, %v598, %v699
      %v784 = vsel %vm481, %v601, %v701
      %v785 = vsel %vm481, %v602, %v703
      %v786 = vsel %vm481, %v605, %v705
      %v787 = vsel %vm481, %v606, %v707
      %v788 = vsel %vm481, %v609, %v709
      %v789 = vsel %vm481, %v610, %v711
      %v790 = vsel %vm481, %v613, %v713
      %v791 = vsel %vm481, %v614, %v715
      %v792 = vsel %vm481, %v617, %v717
      %v793 = vsel %vm481, %v618, %v719
      %v794 = vsel %vm481, %v621, %v721
      %v795 = vsel %vm481, %v622, %v723
      %v796 = vsel %vm481, %v625, %v725
      %v797 = vsel %vm481, %v626, %v727
      %v798 = vsel %vm481, %v629, %v729
      %v799 = vsel %vm481, %v630, %v731
      %v800 = vsel %vm481, %v633, %v733
      %v801 = vsel %vm481, %v634, %v735
      %v802 = vsel %vm481, %v637, %v737
      %v803 = vsel %vm481, %v638, %v739
      %v804 = vpack.c.bf16 %v772, %v772
      %v805 = vpack.c.bf16 %v773, %v773
      %v806 = vpack.c.bf16 %v774, %v774
      %v807 = vpack.c.bf16 %v775, %v775
      %v808 = vpack.c.bf16 %v776, %v776
      %v809 = vpack.c.bf16 %v777, %v777
      %v810 = vpack.c.bf16 %v778, %v778
      %v811 = vpack.c.bf16 %v779, %v779
      %v812 = vpack.c.bf16 %v780, %v780
      %v813 = vpack.c.bf16 %v781, %v781
      %v814 = vpack.c.bf16 %v782, %v782
      %v815 = vpack.c.bf16 %v783, %v783
      %v816 = vpack.c.bf16 %v784, %v784
      %v817 = vpack.c.bf16 %v785, %v785
      %v818 = vpack.c.bf16 %v786, %v786
      %v819 = vpack.c.bf16 %v787, %v787
      %v820 = vpack.c.bf16 %v788, %v788
      %v821 = vpack.c.bf16 %v789, %v789
      %v822 = vpack.c.bf16 %v790, %v790
      %v823 = vpack.c.bf16 %v791, %v791
      %v824 = vpack.c.bf16 %v792, %v792
      %v825 = vpack.c.bf16 %v793, %v793
      %v826 = vpack.c.bf16 %v794, %v794
      %v827 = vpack.c.bf16 %v795, %v795
      %v828 = vpack.c.bf16 %v796, %v796
      %v829 = vpack.c.bf16 %v797, %v797
      %v830 = vpack.c.bf16 %v798, %v798
      %v831 = vpack.c.bf16 %v799, %v799
      %v832 = vpack.c.bf16 %v800, %v800
      %v833 = vpack.c.bf16 %v801, %v801
      %v834 = vpack.c.bf16 %v802, %v802
      %v835 = vpack.c.bf16 %v803, %v803
      %836 = vst [vmem:[#allocation2 + $0x4] sm:$0xf] %v804
      %837 = vst [vmem:[#allocation2 + $0x18] sm:$0xf] %v805
      %838 = vst [vmem:[#allocation2 + $0x2c] sm:$0xf] %v806
      %839 = vst [vmem:[#allocation2 + $0x40] sm:$0xf] %v807
      %840 = vst [vmem:[#allocation2 + $0x54] sm:$0xf] %v808
      %841 = vst [vmem:[#allocation2 + $0x68] sm:$0xf] %v809
      %842 = vst [vmem:[#allocation2 + $0x7c] sm:$0xf] %v810
      %843 = vst [vmem:[#allocation2 + $0x90] sm:$0xf] %v811
      %844 = vst [vmem:[#allocation2 + $0xa4] sm:$0xf] %v812
      %845 = vst [vmem:[#allocation2 + $0xb8] sm:$0xf] %v813
      %846 = vst [vmem:[#allocation2 + $0xcc] sm:$0xf] %v814
      %847 = vst [vmem:[#allocation2 + $0xe0] sm:$0xf] %v815
      %848 = vst [vmem:[#allocation2 + $0xf4] sm:$0xf] %v816
      %849 = vst [vmem:[#allocation2 + $0x108] sm:$0xf] %v817
      %850 = vst [vmem:[#allocation2 + $0x11c] sm:$0xf] %v818
      %851 = vst [vmem:[#allocation2 + $0x130] sm:$0xf] %v819
      %852 = vst [vmem:[#allocation2 + $0x144] sm:$0xf] %v820
      %853 = vst [vmem:[#allocation2 + $0x158] sm:$0xf] %v821
      %854 = vst [vmem:[#allocation2 + $0x16c] sm:$0xf] %v822
      %855 = vst [vmem:[#allocation2 + $0x180] sm:$0xf] %v823
      %856 = vst [vmem:[#allocation2 + $0x194] sm:$0xf] %v824
      %857 = vst [vmem:[#allocation2 + $0x1a8] sm:$0xf] %v825
      %858 = vst [vmem:[#allocation2 + $0x1bc] sm:$0xf] %v826
      %859 = vst [vmem:[#allocation2 + $0x1d0] sm:$0xf] %v827
      %860 = vst [vmem:[#allocation2 + $0x1e4] sm:$0xf] %v828
      %861 = vst [vmem:[#allocation2 + $0x1f8] sm:$0xf] %v829
      %862 = vst [vmem:[#allocation2 + $0x20c] sm:$0xf] %v830
      %863 = vst [vmem:[#allocation2 + $0x220] sm:$0xf] %v831
      %864 = vst [vmem:[#allocation2 + $0x234] sm:$0xf] %v832
      %865 = vst [vmem:[#allocation2 + $0x248] sm:$0xf] %v833
      %866 = vst [vmem:[#allocation2 + $0x25c] sm:$0xf] %v834
      %867 = vst [vmem:[#allocation2 + $0x270] sm:$0xf] %v835
      %v868 = vrot.slane %v261, 1
      %v869 = vrot.slane %v262, 1
      %v870 = vsel %vm576, %v868, %v869
      %v871 = vsel %vm576, %v869, %v577
      %872 = vrot.lane.b32.xlu0 %v581, 64
      %v873 = vpop.permute.xlu0 %872
      %874 = vrot.lane.b32.xlu0 %v582, 64
      %v875 = vpop.permute.xlu0 %874
      %876 = vrot.lane.b32.xlu0 %v585, 64
      %v877 = vpop.permute.xlu0 %876
      %878 = vrot.lane.b32.xlu0 %v586, 64
      %v879 = vpop.permute.xlu0 %878
      %880 = vrot.lane.b32.xlu0 %v589, 64
      %v881 = vpop.permute.xlu0 %880
      %882 = vrot.lane.b32.xlu0 %v590, 64
      %v883 = vpop.permute.xlu0 %882
      %884 = vrot.lane.b32.xlu0 %v593, 64
      %v885 = vpop.permute.xlu0 %884
      %886 = vrot.lane.b32.xlu0 %v594, 64
      %v887 = vpop.permute.xlu0 %886
      %888 = vrot.lane.b32.xlu0 %v597, 64
      %v889 = vpop.permute.xlu0 %888
      %890 = vrot.lane.b32.xlu0 %v598, 64
      %v891 = vpop.permute.xlu0 %890
      %892 = vrot.lane.b32.xlu0 %v601, 64
      %v893 = vpop.permute.xlu0 %892
      %894 = vrot.lane.b32.xlu0 %v602, 64
      %v895 = vpop.permute.xlu0 %894
      %896 = vrot.lane.b32.xlu0 %v605, 64
      %v897 = vpop.permute.xlu0 %896
      %898 = vrot.lane.b32.xlu0 %v606, 64
      %v899 = vpop.permute.xlu0 %898
      %900 = vrot.lane.b32.xlu0 %v609, 64
      %v901 = vpop.permute.xlu0 %900
      %902 = vrot.lane.b32.xlu0 %v610, 64
      %v903 = vpop.permute.xlu0 %902
      %904 = vrot.lane.b32.xlu0 %v613, 64
      %v905 = vpop.permute.xlu0 %904
      %906 = vrot.lane.b32.xlu0 %v614, 64
      %v907 = vpop.permute.xlu0 %906
      %908 = vrot.lane.b32.xlu0 %v617, 64
      %v909 = vpop.permute.xlu0 %908
      %910 = vrot.lane.b32.xlu0 %v618, 64
      %v911 = vpop.permute.xlu0 %910
      %912 = vrot.lane.b32.xlu0 %v621, 64
      %v913 = vpop.permute.xlu0 %912
      %914 = vrot.lane.b32.xlu0 %v622, 64
      %v915 = vpop.permute.xlu0 %914
      %916 = vrot.lane.b32.xlu0 %v625, 64
      %v917 = vpop.permute.xlu0 %916
      %918 = vrot.lane.b32.xlu0 %v626, 64
      %v919 = vpop.permute.xlu0 %918
      %920 = vrot.lane.b32.xlu0 %v629, 64
      %v921 = vpop.permute.xlu0 %920
      %922 = vrot.lane.b32.xlu0 %v630, 64
      %v923 = vpop.permute.xlu0 %922
      %924 = vrot.lane.b32.xlu0 %v633, 64
      %v925 = vpop.permute.xlu0 %924
      %926 = vrot.lane.b32.xlu0 %v634, 64
      %v927 = vpop.permute.xlu0 %926
      %928 = vrot.lane.b32.xlu0 %v637, 64
      %v929 = vpop.permute.xlu0 %928
      %930 = vrot.lane.b32.xlu0 %v638, 64
      %v931 = vpop.permute.xlu0 %930
      %932 = vrot.lane.b32.xlu0 %v870, 64
      %v933 = vpop.permute.xlu0 %932
      %934 = vrot.lane.b32.xlu0 %v871, 64
      %v935 = vpop.permute.xlu0 %934
      %v968 = vsel %vm481, %v231, %v873
      %v969 = vsel %vm481, %v232, %v875
      %v970 = vsel %vm481, %v233, %v877
      %v971 = vsel %vm481, %v234, %v879
      %v972 = vsel %vm481, %v235, %v881
      %v973 = vsel %vm481, %v236, %v883
      %v974 = vsel %vm481, %v237, %v885
      %v975 = vsel %vm481, %v238, %v887
      %v976 = vsel %vm481, %v239, %v889
      %v977 = vsel %vm481, %v240, %v891
      %v978 = vsel %vm481, %v241, %v893
      %v979 = vsel %vm481, %v242, %v895
      %v980 = vsel %vm481, %v243, %v897
      %v981 = vsel %vm481, %v244, %v899
      %v982 = vsel %vm481, %v245, %v901
      %v983 = vsel %vm481, %v246, %v903
      %v984 = vsel %vm481, %v247, %v905
      %v985 = vsel %vm481, %v248, %v907
      %v986 = vsel %vm481, %v249, %v909
      %v987 = vsel %vm481, %v250, %v911
      %v988 = vsel %vm481, %v251, %v913
      %v989 = vsel %vm481, %v252, %v915
      %v990 = vsel %vm481, %v253, %v917
      %v991 = vsel %vm481, %v254, %v919
      %v992 = vsel %vm481, %v255, %v921
      %v993 = vsel %vm481, %v256, %v923
      %v994 = vsel %vm481, %v257, %v925
      %v995 = vsel %vm481, %v258, %v927
      %v996 = vsel %vm481, %v259, %v929
      %v997 = vsel %vm481, %v260, %v931
      %v998 = vsel %vm481, %v261, %v933
      %v999 = vsel %vm481, %v262, %v935
      %v1000 = vpack.c.bf16 %v968, %v968
      %v1001 = vpack.c.bf16 %v969, %v969
      %v1002 = vpack.c.bf16 %v970, %v970
      %v1003 = vpack.c.bf16 %v971, %v971
      %v1004 = vpack.c.bf16 %v972, %v972
      %v1005 = vpack.c.bf16 %v973, %v973
      %v1006 = vpack.c.bf16 %v974, %v974
      %v1007 = vpack.c.bf16 %v975, %v975
      %v1008 = vpack.c.bf16 %v976, %v976
      %v1009 = vpack.c.bf16 %v977, %v977
      %v1010 = vpack.c.bf16 %v978, %v978
      %v1011 = vpack.c.bf16 %v979, %v979
      %v1012 = vpack.c.bf16 %v980, %v980
      %v1013 = vpack.c.bf16 %v981, %v981
      %v1014 = vpack.c.bf16 %v982, %v982
      %v1015 = vpack.c.bf16 %v983, %v983
      %v1016 = vpack.c.bf16 %v984, %v984
      %v1017 = vpack.c.bf16 %v985, %v985
      %v1018 = vpack.c.bf16 %v986, %v986
      %v1019 = vpack.c.bf16 %v987, %v987
      %v1020 = vpack.c.bf16 %v988, %v988
      %v1021 = vpack.c.bf16 %v989, %v989
      %v1022 = vpack.c.bf16 %v990, %v990
      %v1023 = vpack.c.bf16 %v991, %v991
      %v1024 = vpack.c.bf16 %v992, %v992
      %v1025 = vpack.c.bf16 %v993, %v993
      %v1026 = vpack.c.bf16 %v994, %v994
      %v1027 = vpack.c.bf16 %v995, %v995
      %v1028 = vpack.c.bf16 %v996, %v996
      %v1029 = vpack.c.bf16 %v997, %v997
      %v1030 = vpack.c.bf16 %v998, %v998
      %v1031 = vpack.c.bf16 %v999, %v999
      %1032 = vst [vmem:[#allocation2 + $0x8] sm:$0xf] %v1000
      %1033 = vst [vmem:[#allocation2 + $0x1c] sm:$0xf] %v1001
      %1034 = vst [vmem:[#allocation2 + $0x30] sm:$0xf] %v1002
      %1035 = vst [vmem:[#allocation2 + $0x44] sm:$0xf] %v1003
      %1036 = vst [vmem:[#allocation2 + $0x58] sm:$0xf] %v1004
      %1037 = vst [vmem:[#allocation2 + $0x6c] sm:$0xf] %v1005
      %1038 = vst [vmem:[#allocation2 + $0x80] sm:$0xf] %v1006
      %1039 = vst [vmem:[#allocation2 + $0x94] sm:$0xf] %v1007
      %1040 = vst [vmem:[#allocation2 + $0xa8] sm:$0xf] %v1008
      %1041 = vst [vmem:[#allocation2 + $0xbc] sm:$0xf] %v1009
      %1042 = vst [vmem:[#allocation2 + $0xd0] sm:$0xf] %v1010
      %1043 = vst [vmem:[#allocation2 + $0xe4] sm:$0xf] %v1011
      %1044 = vst [vmem:[#allocation2 + $0xf8] sm:$0xf] %v1012
      %1045 = vst [vmem:[#allocation2 + $0x10c] sm:$0xf] %v1013
      %1046 = vst [vmem:[#allocation2 + $0x120] sm:$0xf] %v1014
      %1047 = vst [vmem:[#allocation2 + $0x134] sm:$0xf] %v1015
      %1048 = vst [vmem:[#allocation2 + $0x148] sm:$0xf] %v1016
      %1049 = vst [vmem:[#allocation2 + $0x15c] sm:$0xf] %v1017
      %1050 = vst [vmem:[#allocation2 + $0x170] sm:$0xf] %v1018
      %1051 = vst [vmem:[#allocation2 + $0x184] sm:$0xf] %v1019
      %1052 = vst [vmem:[#allocation2 + $0x198] sm:$0xf] %v1020
      %1053 = vst [vmem:[#allocation2 + $0x1ac] sm:$0xf] %v1021
      %1054 = vst [vmem:[#allocation2 + $0x1c0] sm:$0xf] %v1022
      %1055 = vst [vmem:[#allocation2 + $0x1d4] sm:$0xf] %v1023
      %1056 = vst [vmem:[#allocation2 + $0x1e8] sm:$0xf] %v1024
      %1057 = vst [vmem:[#allocation2 + $0x1fc] sm:$0xf] %v1025
      %1058 = vst [vmem:[#allocation2 + $0x210] sm:$0xf] %v1026
      %1059 = vst [vmem:[#allocation2 + $0x224] sm:$0xf] %v1027
      %1060 = vst [vmem:[#allocation2 + $0x238] sm:$0xf] %v1028
      %1061 = vst [vmem:[#allocation2 + $0x24c] sm:$0xf] %v1029
      %1062 = vst [vmem:[#allocation2 + $0x260] sm:$0xf] %v1030
      %1063 = vst [vmem:[#allocation2 + $0x274] sm:$0xf] %v1031
      %1066 = vrot.lane.b32.xlu0 %v261, 64
      %v1067 = vpop.permute.xlu0 %1066
      %1068 = vrot.lane.b32.xlu0 %v262, 64
      %v1069 = vpop.permute.xlu0 %1068
      %v1072 = vsel %vm481, %v673, %v1067
      %v1073 = vsel %vm481, %v675, %v1069
      %v1074 = vpack.c.bf16 %v1072, %v1072
      %v1075 = vpack.c.bf16 %v1073, %v1073
      %1076 = vst [vmem:[#allocation2 + $0xc] sm:$0xf] %v516
      %1077 = vst [vmem:[#allocation2 + $0x20] sm:$0xf] %v517
      %1078 = vst [vmem:[#allocation2 + $0x34] sm:$0xf] %v518
      %1079 = vst [vmem:[#allocation2 + $0x48] sm:$0xf] %v519
      %1080 = vst [vmem:[#allocation2 + $0x5c] sm:$0xf] %v520
      %1081 = vst [vmem:[#allocation2 + $0x70] sm:$0xf] %v521
      %1082 = vst [vmem:[#allocation2 + $0x84] sm:$0xf] %v522
      %1083 = vst [vmem:[#allocation2 + $0x98] sm:$0xf] %v523
      %1084 = vst [vmem:[#allocation2 + $0xac] sm:$0xf] %v524
      %1085 = vst [vmem:[#allocation2 + $0xc0] sm:$0xf] %v525
      %1086 = vst [vmem:[#allocation2 + $0xd4] sm:$0xf] %v526
      %1087 = vst [vmem:[#allocation2 + $0xe8] sm:$0xf] %v527
      %1088 = vst [vmem:[#allocation2 + $0xfc] sm:$0xf] %v528
      %1089 = vst [vmem:[#allocation2 + $0x110] sm:$0xf] %v529
      %1090 = vst [vmem:[#allocation2 + $0x124] sm:$0xf] %v530
      %1091 = vst [vmem:[#allocation2 + $0x138] sm:$0xf] %v531
      %1092 = vst [vmem:[#allocation2 + $0x14c] sm:$0xf] %v532
      %1093 = vst [vmem:[#allocation2 + $0x160] sm:$0xf] %v533
      %1094 = vst [vmem:[#allocation2 + $0x174] sm:$0xf] %v534
      %1095 = vst [vmem:[#allocation2 + $0x188] sm:$0xf] %v535
      %1096 = vst [vmem:[#allocation2 + $0x19c] sm:$0xf] %v536
      %1097 = vst [vmem:[#allocation2 + $0x1b0] sm:$0xf] %v537
      %1098 = vst [vmem:[#allocation2 + $0x1c4] sm:$0xf] %v538
      %1099 = vst [vmem:[#allocation2 + $0x1d8] sm:$0xf] %v539
      %1100 = vst [vmem:[#allocation2 + $0x1ec] sm:$0xf] %v540
      %1101 = vst [vmem:[#allocation2 + $0x200] sm:$0xf] %v541
      %1102 = vst [vmem:[#allocation2 + $0x214] sm:$0xf] %v542
      %1103 = vst [vmem:[#allocation2 + $0x228] sm:$0xf] %v543
      %1104 = vst [vmem:[#allocation2 + $0x23c] sm:$0xf] %v1074
      %1105 = vst [vmem:[#allocation2 + $0x250] sm:$0xf] %v1075
      %1106 = vst [vmem:[#allocation2 + $0x264] sm:$0xf] %v513
      %1107 = vst [vmem:[#allocation2 + $0x278] sm:$0xf] %v513
      %v1110 = vsel %vm481, %v585, 0.0
      %v1111 = vsel %vm481, %v586, 0.0
      %v1112 = vsel %vm481, %v589, 0.0
      %v1113 = vsel %vm481, %v590, 0.0
      %v1114 = vsel %vm481, %v593, 0.0
      %v1115 = vsel %vm481, %v594, 0.0
      %v1116 = vsel %vm481, %v597, 0.0
      %v1117 = vsel %vm481, %v598, 0.0
      %v1118 = vsel %vm481, %v601, 0.0
      %v1119 = vsel %vm481, %v602, 0.0
      %v1120 = vsel %vm481, %v605, 0.0
      %v1121 = vsel %vm481, %v606, 0.0
      %v1122 = vsel %vm481, %v609, 0.0
      %v1123 = vsel %vm481, %v610, 0.0
      %v1124 = vsel %vm481, %v613, 0.0
      %v1125 = vsel %vm481, %v614, 0.0
      %v1126 = vsel %vm481, %v617, 0.0
      %v1127 = vsel %vm481, %v618, 0.0
      %v1128 = vsel %vm481, %v621, 0.0
      %v1129 = vsel %vm481, %v622, 0.0
      %v1130 = vsel %vm481, %v625, 0.0
      %v1131 = vsel %vm481, %v626, 0.0
      %v1132 = vsel %vm481, %v629, 0.0
      %v1133 = vsel %vm481, %v630, 0.0
      %v1134 = vsel %vm481, %v633, 0.0
      %v1135 = vsel %vm481, %v634, 0.0
      %v1136 = vsel %vm481, %v637, 0.0
      %v1137 = vsel %vm481, %v638, 0.0
      %v1138 = vsel %vm481, %v870, 0.0
      %v1139 = vsel %vm481, %v871, 0.0
      %v1140 = vsel %vm481, %v578, 0.0
      %v1141 = vpack.c.bf16 %v1110, %v1110
      %v1142 = vpack.c.bf16 %v1111, %v1111
      %v1143 = vpack.c.bf16 %v1112, %v1112
      %v1144 = vpack.c.bf16 %v1113, %v1113
      %v1145 = vpack.c.bf16 %v1114, %v1114
      %v1146 = vpack.c.bf16 %v1115, %v1115
      %v1147 = vpack.c.bf16 %v1116, %v1116
      %v1148 = vpack.c.bf16 %v1117, %v1117
      %v1149 = vpack.c.bf16 %v1118, %v1118
      %v1150 = vpack.c.bf16 %v1119, %v1119
      %v1151 = vpack.c.bf16 %v1120, %v1120
      %v1152 = vpack.c.bf16 %v1121, %v1121
      %v1153 = vpack.c.bf16 %v1122, %v1122
      %v1154 = vpack.c.bf16 %v1123, %v1123
      %v1155 = vpack.c.bf16 %v1124, %v1124
      %v1156 = vpack.c.bf16 %v1125, %v1125
      %v1157 = vpack.c.bf16 %v1126, %v1126
      %v1158 = vpack.c.bf16 %v1127, %v1127
      %v1159 = vpack.c.bf16 %v1128, %v1128
      %v1160 = vpack.c.bf16 %v1129, %v1129
      %v1161 = vpack.c.bf16 %v1130, %v1130
      %v1162 = vpack.c.bf16 %v1131, %v1131
      %v1163 = vpack.c.bf16 %v1132, %v1132
      %v1164 = vpack.c.bf16 %v1133, %v1133
      %v1165 = vpack.c.bf16 %v1134, %v1134
      %v1166 = vpack.c.bf16 %v1135, %v1135
      %v1167 = vpack.c.bf16 %v1136, %v1136
      %v1168 = vpack.c.bf16 %v1137, %v1137
      %v1169 = vpack.c.bf16 %v1138, %v1138
      %v1170 = vpack.c.bf16 %v1139, %v1139
      %v1171 = vpack.c.bf16 %v1140, %v1140
      %1172 = vst [vmem:[#allocation2 + $0x10] sm:$0xf] %v1141
      %1173 = vst [vmem:[#allocation2 + $0x24] sm:$0xf] %v1142
      %1174 = vst [vmem:[#allocation2 + $0x38] sm:$0xf] %v1143
      %1175 = vst [vmem:[#allocation2 + $0x4c] sm:$0xf] %v1144
      %1176 = vst [vmem:[#allocation2 + $0x60] sm:$0xf] %v1145
      %1177 = vst [vmem:[#allocation2 + $0x74] sm:$0xf] %v1146
      %1178 = vst [vmem:[#allocation2 + $0x88] sm:$0xf] %v1147
      %1179 = vst [vmem:[#allocation2 + $0x9c] sm:$0xf] %v1148
      %1180 = vst [vmem:[#allocation2 + $0xb0] sm:$0xf] %v1149
      %1181 = vst [vmem:[#allocation2 + $0xc4] sm:$0xf] %v1150
      %1182 = vst [vmem:[#allocation2 + $0xd8] sm:$0xf] %v1151
      %1183 = vst [vmem:[#allocation2 + $0xec] sm:$0xf] %v1152
      %1184 = vst [vmem:[#allocation2 + $0x100] sm:$0xf] %v1153
      %1185 = vst [vmem:[#allocation2 + $0x114] sm:$0xf] %v1154
      %1186 = vst [vmem:[#allocation2 + $0x128] sm:$0xf] %v1155
      %1187 = vst [vmem:[#allocation2 + $0x13c] sm:$0xf] %v1156
      %1188 = vst [vmem:[#allocation2 + $0x150] sm:$0xf] %v1157
      %1189 = vst [vmem:[#allocation2 + $0x164] sm:$0xf] %v1158
      %1190 = vst [vmem:[#allocation2 + $0x178] sm:$0xf] %v1159
      %1191 = vst [vmem:[#allocation2 + $0x18c] sm:$0xf] %v1160
      %1192 = vst [vmem:[#allocation2 + $0x1a0] sm:$0xf] %v1161
      %1193 = vst [vmem:[#allocation2 + $0x1b4] sm:$0xf] %v1162
      %1194 = vst [vmem:[#allocation2 + $0x1c8] sm:$0xf] %v1163
      %1195 = vst [vmem:[#allocation2 + $0x1dc] sm:$0xf] %v1164
      %1196 = vst [vmem:[#allocation2 + $0x1f0] sm:$0xf] %v1165
      %1197 = vst [vmem:[#allocation2 + $0x204] sm:$0xf] %v1166
      %1198 = vst [vmem:[#allocation2 + $0x218] sm:$0xf] %v1167
      %1199 = vst [vmem:[#allocation2 + $0x22c] sm:$0xf] %v1168
      %1200 = vst [vmem:[#allocation2 + $0x240] sm:$0xf] %v1169
      %1201 = vst [vmem:[#allocation2 + $0x254] sm:$0xf] %v1170
      %1202 = vst [vmem:[#allocation2 + $0x268] sm:$0xf] %v1171
      %1203 = vst [vmem:[#allocation2 + $0x27c] sm:$0xf] %v1171
      %v1204 = vld [vmem:[#allocation2] sm:$0xff]
      %v1205 = vld [vmem:[#allocation2 + $0x8] sm:$0xff]
      %v1206 = vld [vmem:[#allocation2 + $0x10] sm:$0xf]
      %v1207 = vld [vmem:[#allocation2 + $0x14] sm:$0xff]
      %v1208 = vld [vmem:[#allocation2 + $0x1c] sm:$0xff]
      %v1209 = vld [vmem:[#allocation2 + $0x24] sm:$0xf]
      %v1210 = vld [vmem:[#allocation2 + $0x28] sm:$0xff]
      %v1211 = vld [vmem:[#allocation2 + $0x30] sm:$0xff]
      %v1212 = vld [vmem:[#allocation2 + $0x38] sm:$0xf]
      %v1213 = vld [vmem:[#allocation2 + $0x3c] sm:$0xff]
      %v1214 = vld [vmem:[#allocation2 + $0x44] sm:$0xff]
      %v1215 = vld [vmem:[#allocation2 + $0x4c] sm:$0xf]
      %v1216 = vld [vmem:[#allocation2 + $0x50] sm:$0xff]
      %v1217 = vld [vmem:[#allocation2 + $0x58] sm:$0xff]
      %v1218 = vld [vmem:[#allocation2 + $0x60] sm:$0xf]
      %v1219 = vld [vmem:[#allocation2 + $0x64] sm:$0xff]
      %v1220 = vld [vmem:[#allocation2 + $0x6c] sm:$0xff]
      %v1221 = vld [vmem:[#allocation2 + $0x74] sm:$0xf]
      %v1222 = vld [vmem:[#allocation2 + $0x78] sm:$0xff]
      %v1223 = vld [vmem:[#allocation2 + $0x80] sm:$0xff]
      %v1224 = vld [vmem:[#allocation2 + $0x88] sm:$0xf]
      %v1225 = vld [vmem:[#allocation2 + $0x8c] sm:$0xff]
      %v1226 = vld [vmem:[#allocation2 + $0x94] sm:$0xff]
      %v1227 = vld [vmem:[#allocation2 + $0x9c] sm:$0xf]
      %v1228 = vld [vmem:[#allocation2 + $0xa0] sm:$0xff]
      %v1229 = vld [vmem:[#allocation2 + $0xa8] sm:$0xff]
      %v1230 = vld [vmem:[#allocation2 + $0xb0] sm:$0xf]
      %v1231 = vld [vmem:[#allocation2 + $0xb4] sm:$0xff]
      %v1232 = vld [vmem:[#allocation2 + $0xbc] sm:$0xff]
      %v1233 = vld [vmem:[#allocation2 + $0xc4] sm:$0xf]
      %v1234 = vld [vmem:[#allocation2 + $0xc8] sm:$0xff]
      %v1235 = vld [vmem:[#allocation2 + $0xd0] sm:$0xff]
      %v1236 = vld [vmem:[#allocation2 + $0xd8] sm:$0xf]
      %v1237 = vld [vmem:[#allocation2 + $0xdc] sm:$0xff]
      %v1238 = vld [vmem:[#allocation2 + $0xe4] sm:$0xff]
      %v1239 = vld [vmem:[#allocation2 + $0xec] sm:$0xf]
      %v1240 = vld [vmem:[#allocation2 + $0xf0] sm:$0xff]
      %v1241 = vld [vmem:[#allocation2 + $0xf8] sm:$0xff]
      %v1242 = vld [vmem:[#allocation2 + $0x100] sm:$0xf]
      %v1243 = vld [vmem:[#allocation2 + $0x104] sm:$0xff]
      %v1244 = vld [vmem:[#allocation2 + $0x10c] sm:$0xff]
      %v1245 = vld [vmem:[#allocation2 + $0x114] sm:$0xf]
      %v1246 = vld [vmem:[#allocation2 + $0x118] sm:$0xff]
      %v1247 = vld [vmem:[#allocation2 + $0x120] sm:$0xff]
      %v1248 = vld [vmem:[#allocation2 + $0x128] sm:$0xf]
      %v1249 = vld [vmem:[#allocation2 + $0x12c] sm:$0xff]
      %v1250 = vld [vmem:[#allocation2 + $0x134] sm:$0xff]
      %v1251 = vld [vmem:[#allocation2 + $0x13c] sm:$0xf]
      %v1252 = vld [vmem:[#allocation2 + $0x140] sm:$0xff]
      %v1253 = vld [vmem:[#allocation2 + $0x148] sm:$0xff]
      %v1254 = vld [vmem:[#allocation2 + $0x150] sm:$0xf]
      %v1255 = vld [vmem:[#allocation2 + $0x154] sm:$0xff]
      %v1256 = vld [vmem:[#allocation2 + $0x15c] sm:$0xff]
      %v1257 = vld [vmem:[#allocation2 + $0x164] sm:$0xf]
      %v1258 = vld [vmem:[#allocation2 + $0x168] sm:$0xff]
      %v1259 = vld [vmem:[#allocation2 + $0x170] sm:$0xff]
      %v1260 = vld [vmem:[#allocation2 + $0x178] sm:$0xf]
      %v1261 = vld [vmem:[#allocation2 + $0x17c] sm:$0xff]
      %v1262 = vld [vmem:[#allocation2 + $0x184] sm:$0xff]
      %v1263 = vld [vmem:[#allocation2 + $0x18c] sm:$0xf]
      %v1264 = vld [vmem:[#allocation2 + $0x190] sm:$0xff]
      %v1265 = vld [vmem:[#allocation2 + $0x198] sm:$0xff]
      %v1266 = vld [vmem:[#allocation2 + $0x1a0] sm:$0xf]
      %v1267 = vld [vmem:[#allocation2 + $0x1a4] sm:$0xff]
      %v1268 = vld [vmem:[#allocation2 + $0x1ac] sm:$0xff]
      %v1269 = vld [vmem:[#allocation2 + $0x1b4] sm:$0xf]
      %v1270 = vld [vmem:[#allocation2 + $0x1b8] sm:$0xff]
      %v1271 = vld [vmem:[#allocation2 + $0x1c0] sm:$0xff]
      %v1272 = vld [vmem:[#allocation2 + $0x1c8] sm:$0xf]
      %v1273 = vld [vmem:[#allocation2 + $0x1cc] sm:$0xff]
      %v1274 = vld [vmem:[#allocation2 + $0x1d4] sm:$0xff]
      %v1275 = vld [vmem:[#allocation2 + $0x1dc] sm:$0xf]
      %v1276 = vld [vmem:[#allocation2 + $0x1e0] sm:$0xff]
      %v1277 = vld [vmem:[#allocation2 + $0x1e8] sm:$0xff]
      %v1278 = vld [vmem:[#allocation2 + $0x1f0] sm:$0xf]
      %v1279 = vld [vmem:[#allocation2 + $0x1f4] sm:$0xff]
      %v1280 = vld [vmem:[#allocation2 + $0x1fc] sm:$0xff]
      %v1281 = vld [vmem:[#allocation2 + $0x204] sm:$0xf]
      %v1282 = vld [vmem:[#allocation2 + $0x208] sm:$0xff]
      %v1283 = vld [vmem:[#allocation2 + $0x210] sm:$0xff]
      %v1284 = vld [vmem:[#allocation2 + $0x218] sm:$0xf]
      %v1285 = vld [vmem:[#allocation2 + $0x21c] sm:$0xff]
      %v1286 = vld [vmem:[#allocation2 + $0x224] sm:$0xff]
      %v1287 = vld [vmem:[#allocation2 + $0x22c] sm:$0xf]
      %v1288 = vld [vmem:[#allocation2 + $0x230] sm:$0xff]
      %v1289 = vld [vmem:[#allocation2 + $0x238] sm:$0xff]
      %v1290 = vld [vmem:[#allocation2 + $0x240] sm:$0xf]
      %v1291 = vld [vmem:[#allocation2 + $0x244] sm:$0xff]
      %v1292 = vld [vmem:[#allocation2 + $0x24c] sm:$0xff]
      %v1293 = vld [vmem:[#allocation2 + $0x254] sm:$0xf]
      %v1294 = vld [vmem:[#allocation2 + $0x258] sm:$0xff]
      %v1295 = vld [vmem:[#allocation2 + $0x260] sm:$0xff]
      %v1296 = vld [vmem:[#allocation2 + $0x268] sm:$0xf]
      %v1297 = vld [vmem:[#allocation2 + $0x26c] sm:$0xff]
      %v1298 = vld [vmem:[#allocation2 + $0x274] sm:$0xff]
      %v1299 = vld [vmem:[#allocation2 + $0x27c] sm:$0xf]
      %v1300 = vld [vmem:[%s1] sm:$0xf]
      %v1301 = vld [vmem:[%s1 + $0x4] sm:$0xf]
      %v1302 = vld [vmem:[%s1 + $0x8] sm:$0xf]
      %v1303 = vld [vmem:[%s1 + $0xc] sm:$0xf]
      %v1304 = vld [vmem:[%s1 + $0x10] sm:$0xf]
      %v1305 = vld [vmem:[%s1 + $0x14] sm:$0xf]
      %v1306 = vld [vmem:[%s1 + $0x18] sm:$0xf]
      %v1307 = vld [vmem:[%s1 + $0x1c] sm:$0xf]
      %v1308 = vld [vmem:[%s1 + $0x20] sm:$0xf]
      %v1309 = vld [vmem:[%s1 + $0x24] sm:$0xf]
      %v1310 = vld [vmem:[%s1 + $0x28] sm:$0xf]
      %v1311 = vld [vmem:[%s1 + $0x2c] sm:$0xf]
      %v1312 = vld [vmem:[%s1 + $0x30] sm:$0xf]
      %v1313 = vld [vmem:[%s1 + $0x34] sm:$0xf]
      %v1314 = vld [vmem:[%s1 + $0x38] sm:$0xf]
      %v1315 = vld [vmem:[%s1 + $0x3c] sm:$0xf]
      %v1316 = vld [vmem:[%s1 + $0x40] sm:$0xf]
      %v1317 = vld [vmem:[%s1 + $0x44] sm:$0xf]
      %v1318 = vld [vmem:[%s1 + $0x48] sm:$0xf]
      %v1319 = vld [vmem:[%s1 + $0x4c] sm:$0xf]
      %v1320 = vld [vmem:[%s1 + $0x50] sm:$0xf]
      %v1321 = vld [vmem:[%s1 + $0x54] sm:$0xf]
      %v1322 = vld [vmem:[%s1 + $0x58] sm:$0xf]
      %v1323 = vld [vmem:[%s1 + $0x5c] sm:$0xf]
      %v1324 = vld [vmem:[%s1 + $0x60] sm:$0xf]
      %v1325 = vld [vmem:[%s1 + $0x64] sm:$0xf]
      %v1326 = vld [vmem:[%s1 + $0x68] sm:$0xf]
      %v1327 = vld [vmem:[%s1 + $0x6c] sm:$0xf]
      %v1328 = vld [vmem:[%s1 + $0x70] sm:$0xf]
      %v1329 = vld [vmem:[%s1 + $0x74] sm:$0xf]
      %v1330 = vld [vmem:[%s1 + $0x78] sm:$0xf]
      %v1331 = vld [vmem:[%s1 + $0x7c] sm:$0xf]
      %v1332 = vld [vmem:[%s1 + $0x80] sm:$0xf]
      %v1333 = vld [vmem:[%s1 + $0x84] sm:$0xf]
      %v1334 = vld [vmem:[%s1 + $0x88] sm:$0xf]
      %v1335 = vld [vmem:[%s1 + $0x8c] sm:$0xf]
      %v1336 = vld [vmem:[%s1 + $0x90] sm:$0xf]
      %v1337 = vld [vmem:[%s1 + $0x94] sm:$0xf]
      %v1338 = vld [vmem:[%s1 + $0x98] sm:$0xf]
      %v1339 = vld [vmem:[%s1 + $0x9c] sm:$0xf]
      %v1340 = vld [vmem:[%s1 + $0xa0] sm:$0xf]
      %v1341 = vld [vmem:[%s1 + $0xa4] sm:$0xf]
      %v1342 = vld [vmem:[%s1 + $0xa8] sm:$0xf]
      %v1343 = vld [vmem:[%s1 + $0xac] sm:$0xf]
      %v1344 = vld [vmem:[%s1 + $0xb0] sm:$0xf]
      %v1345 = vld [vmem:[%s1 + $0xb4] sm:$0xf]
      %v1346 = vld [vmem:[%s1 + $0xb8] sm:$0xf]
      %v1347 = vld [vmem:[%s1 + $0xbc] sm:$0xf]
      %v1348 = vld [vmem:[%s1 + $0xc0] sm:$0xf]
      %v1349 = vld [vmem:[%s1 + $0xc4] sm:$0xf]
      %v1350 = vld [vmem:[%s1 + $0xc8] sm:$0xf]
      %v1351 = vld [vmem:[%s1 + $0xcc] sm:$0xf]
      %v1352 = vld [vmem:[%s1 + $0xd0] sm:$0xf]
      %v1353 = vld [vmem:[%s1 + $0xd4] sm:$0xf]
      %v1354 = vld [vmem:[%s1 + $0xd8] sm:$0xf]
      %v1355 = vld [vmem:[%s1 + $0xdc] sm:$0xf]
      %v1356 = vld [vmem:[%s1 + $0xe0] sm:$0xf]
      %v1357 = vld [vmem:[%s1 + $0xe4] sm:$0xf]
      %v1358 = vld [vmem:[%s1 + $0xe8] sm:$0xf]
      %v1359 = vld [vmem:[%s1 + $0xec] sm:$0xf]
      %v1360 = vld [vmem:[%s1 + $0xf0] sm:$0xf]
      %v1361 = vld [vmem:[%s1 + $0xf4] sm:$0xf]
      %v1362 = vld [vmem:[%s1 + $0xf8] sm:$0xf]
      %v1363 = vld [vmem:[%s1 + $0xfc] sm:$0xf]
      %v1364 = vld [vmem:[%s1 + $0x100] sm:$0xf]
      %v1365 = vld [vmem:[%s1 + $0x104] sm:$0xf]
      %v1366 = vld [vmem:[%s1 + $0x108] sm:$0xf]
      %v1367 = vld [vmem:[%s1 + $0x10c] sm:$0xf]
      %v1368 = vld [vmem:[%s1 + $0x110] sm:$0xf]
      %v1369 = vld [vmem:[%s1 + $0x114] sm:$0xf]
      %v1370 = vld [vmem:[%s1 + $0x118] sm:$0xf]
      %v1371 = vld [vmem:[%s1 + $0x11c] sm:$0xf]
      %v1372 = vld [vmem:[%s1 + $0x120] sm:$0xf]
      %v1373 = vld [vmem:[%s1 + $0x124] sm:$0xf]
      %v1374 = vld [vmem:[%s1 + $0x128] sm:$0xf]
      %v1375 = vld [vmem:[%s1 + $0x12c] sm:$0xf]
      %v1376 = vld [vmem:[%s1 + $0x130] sm:$0xf]
      %v1377 = vld [vmem:[%s1 + $0x134] sm:$0xf]
      %v1378 = vld [vmem:[%s1 + $0x138] sm:$0xf]
      %v1379 = vld [vmem:[%s1 + $0x13c] sm:$0xf]
      %v1380 = vld [vmem:[%s2] sm:$0x1]
      %v1382 = vperm.slane %v1380, 0
      %v1480 = vunpack.c.l.b16 %v1204
      %v1481 = vunpack.c.h.b16 %v1204
      %v1482 = vunpack.c.l.b16 %v1205
      %v1483 = vunpack.c.h.b16 %v1205
      %v1484 = vunpack.c.l.b16 %v1206
      %v1485 = vunpack.c.l.b16 %v1207
      %v1486 = vunpack.c.h.b16 %v1207
      %v1487 = vunpack.c.l.b16 %v1208
      %v1488 = vunpack.c.h.b16 %v1208
      %v1489 = vunpack.c.l.b16 %v1209
      %v1490 = vunpack.c.l.b16 %v1210
      %v1491 = vunpack.c.h.b16 %v1210
      %v1492 = vunpack.c.l.b16 %v1211
      %v1493 = vunpack.c.h.b16 %v1211
      %v1494 = vunpack.c.l.b16 %v1212
      %v1495 = vunpack.c.l.b16 %v1213
      %v1496 = vunpack.c.h.b16 %v1213
      %v1497 = vunpack.c.l.b16 %v1214
      %v1498 = vunpack.c.h.b16 %v1214
      %v1499 = vunpack.c.l.b16 %v1215
      %v1500 = vunpack.c.l.b16 %v1216
      %v1501 = vunpack.c.h.b16 %v1216
      %v1502 = vunpack.c.l.b16 %v1217
      %v1503 = vunpack.c.h.b16 %v1217
      %v1504 = vunpack.c.l.b16 %v1218
      %v1505 = vunpack.c.l.b16 %v1219
      %v1506 = vunpack.c.h.b16 %v1219
      %v1507 = vunpack.c.l.b16 %v1220
      %v1508 = vunpack.c.h.b16 %v1220
      %v1509 = vunpack.c.l.b16 %v1221
      %v1510 = vunpack.c.l.b16 %v1222
      %v1511 = vunpack.c.h.b16 %v1222
      %v1512 = vunpack.c.l.b16 %v1223
      %v1513 = vunpack.c.h.b16 %v1223
      %v1514 = vunpack.c.l.b16 %v1224
      %v1515 = vunpack.c.l.b16 %v1225
      %v1516 = vunpack.c.h.b16 %v1225
      %v1517 = vunpack.c.l.b16 %v1226
      %v1518 = vunpack.c.h.b16 %v1226
      %v1519 = vunpack.c.l.b16 %v1227
      %v1520 = vunpack.c.l.b16 %v1228
      %v1521 = vunpack.c.h.b16 %v1228
      %v1522 = vunpack.c.l.b16 %v1229
      %v1523 = vunpack.c.h.b16 %v1229
      %v1524 = vunpack.c.l.b16 %v1230
      %v1525 = vunpack.c.l.b16 %v1231
      %v1526 = vunpack.c.h.b16 %v1231
      %v1527 = vunpack.c.l.b16 %v1232
      %v1528 = vunpack.c.h.b16 %v1232
      %v1529 = vunpack.c.l.b16 %v1233
      %v1530 = vunpack.c.l.b16 %v1234
      %v1531 = vunpack.c.h.b16 %v1234
      %v1532 = vunpack.c.l.b16 %v1235
      %v1533 = vunpack.c.h.b16 %v1235
      %v1534 = vunpack.c.l.b16 %v1236
      %v1535 = vunpack.c.l.b16 %v1237
      %v1536 = vunpack.c.h.b16 %v1237
      %v1537 = vunpack.c.l.b16 %v1238
      %v1538 = vunpack.c.h.b16 %v1238
      %v1539 = vunpack.c.l.b16 %v1239
      %v1540 = vunpack.c.l.b16 %v1240
      %v1541 = vunpack.c.h.b16 %v1240
      %v1542 = vunpack.c.l.b16 %v1241
      %v1543 = vunpack.c.h.b16 %v1241
      %v1544 = vunpack.c.l.b16 %v1242
      %v1545 = vunpack.c.l.b16 %v1243
      %v1546 = vunpack.c.h.b16 %v1243
      %v1547 = vunpack.c.l.b16 %v1244
      %v1548 = vunpack.c.h.b16 %v1244
      %v1549 = vunpack.c.l.b16 %v1245
      %v1550 = vunpack.c.l.b16 %v1246
      %v1551 = vunpack.c.h.b16 %v1246
      %v1552 = vunpack.c.l.b16 %v1247
      %v1553 = vunpack.c.h.b16 %v1247
      %v1554 = vunpack.c.l.b16 %v1248
      %v1555 = vunpack.c.l.b16 %v1249
      %v1556 = vunpack.c.h.b16 %v1249
      %v1557 = vunpack.c.l.b16 %v1250
      %v1558 = vunpack.c.h.b16 %v1250
      %v1559 = vunpack.c.l.b16 %v1251
      %v1560 = vunpack.c.l.b16 %v1252
      %v1561 = vunpack.c.h.b16 %v1252
      %v1562 = vunpack.c.l.b16 %v1253
      %v1563 = vunpack.c.h.b16 %v1253
      %v1564 = vunpack.c.l.b16 %v1254
      %v1565 = vunpack.c.l.b16 %v1255
      %v1566 = vunpack.c.h.b16 %v1255
      %v1567 = vunpack.c.l.b16 %v1256
      %v1568 = vunpack.c.h.b16 %v1256
      %v1569 = vunpack.c.l.b16 %v1257
      %v1570 = vunpack.c.l.b16 %v1258
      %v1571 = vunpack.c.h.b16 %v1258
      %v1572 = vunpack.c.l.b16 %v1259
      %v1573 = vunpack.c.h.b16 %v1259
      %v1574 = vunpack.c.l.b16 %v1260
      %v1575 = vunpack.c.l.b16 %v1261
      %v1576 = vunpack.c.h.b16 %v1261
      %v1577 = vunpack.c.l.b16 %v1262
      %v1578 = vunpack.c.h.b16 %v1262
      %v1579 = vunpack.c.l.b16 %v1263
      %v1580 = vunpack.c.l.b16 %v1264
      %v1581 = vunpack.c.h.b16 %v1264
      %v1582 = vunpack.c.l.b16 %v1265
      %v1583 = vunpack.c.h.b16 %v1265
      %v1584 = vunpack.c.l.b16 %v1266
      %v1585 = vunpack.c.l.b16 %v1267
      %v1586 = vunpack.c.h.b16 %v1267
      %v1587 = vunpack.c.l.b16 %v1268
      %v1588 = vunpack.c.h.b16 %v1268
      %v1589 = vunpack.c.l.b16 %v1269
      %v1590 = vunpack.c.l.b16 %v1270
      %v1591 = vunpack.c.h.b16 %v1270
      %v1592 = vunpack.c.l.b16 %v1271
      %v1593 = vunpack.c.h.b16 %v1271
      %v1594 = vunpack.c.l.b16 %v1272
      %v1595 = vunpack.c.l.b16 %v1273
      %v1596 = vunpack.c.h.b16 %v1273
      %v1597 = vunpack.c.l.b16 %v1274
      %v1598 = vunpack.c.h.b16 %v1274
      %v1599 = vunpack.c.l.b16 %v1275
      %v1600 = vunpack.c.l.b16 %v1276
      %v1601 = vunpack.c.h.b16 %v1276
      %v1602 = vunpack.c.l.b16 %v1277
      %v1603 = vunpack.c.h.b16 %v1277
      %v1604 = vunpack.c.l.b16 %v1278
      %v1605 = vunpack.c.l.b16 %v1279
      %v1606 = vunpack.c.h.b16 %v1279
      %v1607 = vunpack.c.l.b16 %v1280
      %v1608 = vunpack.c.h.b16 %v1280
      %v1609 = vunpack.c.l.b16 %v1281
      %v1610 = vunpack.c.l.b16 %v1282
      %v1611 = vunpack.c.h.b16 %v1282
      %v1612 = vunpack.c.l.b16 %v1283
      %v1613 = vunpack.c.h.b16 %v1283
      %v1614 = vunpack.c.l.b16 %v1284
      %v1615 = vunpack.c.l.b16 %v1285
      %v1616 = vunpack.c.h.b16 %v1285
      %v1617 = vunpack.c.l.b16 %v1286
      %v1618 = vunpack.c.h.b16 %v1286
      %v1619 = vunpack.c.l.b16 %v1287
      %v1620 = vunpack.c.l.b16 %v1288
      %v1621 = vunpack.c.h.b16 %v1288
      %v1622 = vunpack.c.l.b16 %v1289
      %v1623 = vunpack.c.h.b16 %v1289
      %v1624 = vunpack.c.l.b16 %v1290
      %v1625 = vunpack.c.l.b16 %v1291
      %v1626 = vunpack.c.h.b16 %v1291
      %v1627 = vunpack.c.l.b16 %v1292
      %v1628 = vunpack.c.h.b16 %v1292
      %v1629 = vunpack.c.l.b16 %v1293
      %v1630 = vunpack.c.l.b16 %v1294
      %v1631 = vunpack.c.h.b16 %v1294
      %v1632 = vunpack.c.l.b16 %v1295
      %v1633 = vunpack.c.h.b16 %v1295
      %v1634 = vunpack.c.l.b16 %v1296
      %v1635 = vunpack.c.l.b16 %v1297
      %v1636 = vunpack.c.h.b16 %v1297
      %v1637 = vunpack.c.l.b16 %v1298
      %v1638 = vunpack.c.h.b16 %v1298
      %v1639 = vunpack.c.l.b16 %v1299
      %v1640 = vpack.c.b16 %v1485, %v1480
      %v1641 = vpack.c.b16 %v1486, %v1481
      %v1642 = vpack.c.b16 %v1487, %v1482
      %v1643 = vpack.c.b16 %v1488, %v1483
      %v1644 = vpack.c.b16 %v1489, %v1484
      %v1645 = vpack.c.b16 %v1495, %v1490
      %v1646 = vpack.c.b16 %v1496, %v1491
      %v1647 = vpack.c.b16 %v1497, %v1492
      %v1648 = vpack.c.b16 %v1498, %v1493
      %v1649 = vpack.c.b16 %v1499, %v1494
      %v1650 = vpack.c.b16 %v1505, %v1500
      %v1651 = vpack.c.b16 %v1506, %v1501
      %v1652 = vpack.c.b16 %v1507, %v1502
      %v1653 = vpack.c.b16 %v1508, %v1503
      %v1654 = vpack.c.b16 %v1509, %v1504
      %v1655 = vpack.c.b16 %v1515, %v1510
      %v1656 = vpack.c.b16 %v1516, %v1511
      %v1657 = vpack.c.b16 %v1517, %v1512
      %v1658 = vpack.c.b16 %v1518, %v1513
      %v1659 = vpack.c.b16 %v1519, %v1514
      %v1660 = vpack.c.b16 %v1525, %v1520
      %v1661 = vpack.c.b16 %v1526, %v1521
      %v1662 = vpack.c.b16 %v1527, %v1522
      %v1663 = vpack.c.b16 %v1528, %v1523
      %v1664 = vpack.c.b16 %v1529, %v1524
      %v1665 = vpack.c.b16 %v1535, %v1530
      %v1666 = vpack.c.b16 %v1536, %v1531
      %v1667 = vpack.c.b16 %v1537, %v1532
      %v1668 = vpack.c.b16 %v1538, %v1533
      %v1669 = vpack.c.b16 %v1539, %v1534
      %v1670 = vpack.c.b16 %v1545, %v1540
      %v1671 = vpack.c.b16 %v1546, %v1541
      %v1672 = vpack.c.b16 %v1547, %v1542
      %v1673 = vpack.c.b16 %v1548, %v1543
      %v1674 = vpack.c.b16 %v1549, %v1544
      %v1675 = vpack.c.b16 %v1555, %v1550
      %v1676 = vpack.c.b16 %v1556, %v1551
      %v1677 = vpack.c.b16 %v1557, %v1552
      %v1678 = vpack.c.b16 %v1558, %v1553
      %v1679 = vpack.c.b16 %v1559, %v1554
      %v1680 = vpack.c.b16 %v1565, %v1560
      %v1681 = vpack.c.b16 %v1566, %v1561
      %v1682 = vpack.c.b16 %v1567, %v1562
      %v1683 = vpack.c.b16 %v1568, %v1563
      %v1684 = vpack.c.b16 %v1569, %v1564
      %v1685 = vpack.c.b16 %v1575, %v1570
      %v1686 = vpack.c.b16 %v1576, %v1571
      %v1687 = vpack.c.b16 %v1577, %v1572
      %v1688 = vpack.c.b16 %v1578, %v1573
      %v1689 = vpack.c.b16 %v1579, %v1574
      %v1690 = vpack.c.b16 %v1585, %v1580
      %v1691 = vpack.c.b16 %v1586, %v1581
      %v1692 = vpack.c.b16 %v1587, %v1582
      %v1693 = vpack.c.b16 %v1588, %v1583
      %v1694 = vpack.c.b16 %v1589, %v1584
      %v1695 = vpack.c.b16 %v1595, %v1590
      %v1696 = vpack.c.b16 %v1596, %v1591
      %v1697 = vpack.c.b16 %v1597, %v1592
      %v1698 = vpack.c.b16 %v1598, %v1593
      %v1699 = vpack.c.b16 %v1599, %v1594
      %v1700 = vpack.c.b16 %v1605, %v1600
      %v1701 = vpack.c.b16 %v1606, %v1601
      %v1702 = vpack.c.b16 %v1607, %v1602
      %v1703 = vpack.c.b16 %v1608, %v1603
      %v1704 = vpack.c.b16 %v1609, %v1604
      %v1705 = vpack.c.b16 %v1615, %v1610
      %v1706 = vpack.c.b16 %v1616, %v1611
      %v1707 = vpack.c.b16 %v1617, %v1612
      %v1708 = vpack.c.b16 %v1618, %v1613
      %v1709 = vpack.c.b16 %v1619, %v1614
      %v1710 = vpack.c.b16 %v1625, %v1620
      %v1711 = vpack.c.b16 %v1626, %v1621
      %v1712 = vpack.c.b16 %v1627, %v1622
      %v1713 = vpack.c.b16 %v1628, %v1623
      %v1714 = vpack.c.b16 %v1629, %v1624
      %v1715 = vpack.c.b16 %v1635, %v1630
      %v1716 = vpack.c.b16 %v1636, %v1631
      %v1717 = vpack.c.b16 %v1637, %v1632
      %v1718 = vpack.c.b16 %v1638, %v1633
      %v1719 = vpack.c.b16 %v1639, %v1634
      %v1880 = vunpack.c.l.b16 %v1300
      %v1881 = vunpack.c.l.b16 %v1301
      %v1882 = vunpack.c.l.b16 %v1302
      %v1883 = vunpack.c.l.b16 %v1303
      %v1884 = vunpack.c.l.b16 %v1304
      %v1885 = vunpack.c.l.b16 %v1305
      %v1886 = vunpack.c.l.b16 %v1306
      %v1887 = vunpack.c.l.b16 %v1307
      %v1888 = vunpack.c.l.b16 %v1308
      %v1889 = vunpack.c.l.b16 %v1309
      %v1890 = vunpack.c.l.b16 %v1310
      %v1891 = vunpack.c.l.b16 %v1311
      %v1892 = vunpack.c.l.b16 %v1312
      %v1893 = vunpack.c.l.b16 %v1313
      %v1894 = vunpack.c.l.b16 %v1314
      %v1895 = vunpack.c.l.b16 %v1315
      %v1896 = vunpack.c.l.b16 %v1316
      %v1897 = vunpack.c.l.b16 %v1317
      %v1898 = vunpack.c.l.b16 %v1318
      %v1899 = vunpack.c.l.b16 %v1319
      %v1900 = vunpack.c.l.b16 %v1320
      %v1901 = vunpack.c.l.b16 %v1321
      %v1902 = vunpack.c.l.b16 %v1322
      %v1903 = vunpack.c.l.b16 %v1323
      %v1904 = vunpack.c.l.b16 %v1324
      %v1905 = vunpack.c.l.b16 %v1325
      %v1906 = vunpack.c.l.b16 %v1326
      %v1907 = vunpack.c.l.b16 %v1327
      %v1908 = vunpack.c.l.b16 %v1328
      %v1909 = vunpack.c.l.b16 %v1329
      %v1910 = vunpack.c.l.b16 %v1330
      %v1911 = vunpack.c.l.b16 %v1331
      %v1912 = vunpack.c.l.b16 %v1332
      %v1913 = vunpack.c.l.b16 %v1333
      %v1914 = vunpack.c.l.b16 %v1334
      %v1915 = vunpack.c.l.b16 %v1335
      %v1916 = vunpack.c.l.b16 %v1336
      %v1917 = vunpack.c.l.b16 %v1337
      %v1918 = vunpack.c.l.b16 %v1338
      %v1919 = vunpack.c.l.b16 %v1339
      %v1920 = vunpack.c.l.b16 %v1340
      %v1921 = vunpack.c.l.b16 %v1341
      %v1922 = vunpack.c.l.b16 %v1342
      %v1923 = vunpack.c.l.b16 %v1343
      %v1924 = vunpack.c.l.b16 %v1344
      %v1925 = vunpack.c.l.b16 %v1345
      %v1926 = vunpack.c.l.b16 %v1346
      %v1927 = vunpack.c.l.b16 %v1347
      %v1928 = vunpack.c.l.b16 %v1348
      %v1929 = vunpack.c.l.b16 %v1349
      %v1930 = vunpack.c.l.b16 %v1350
      %v1931 = vunpack.c.l.b16 %v1351
      %v1932 = vunpack.c.l.b16 %v1352
      %v1933 = vunpack.c.l.b16 %v1353
      %v1934 = vunpack.c.l.b16 %v1354
      %v1935 = vunpack.c.l.b16 %v1355
      %v1936 = vunpack.c.l.b16 %v1356
      %v1937 = vunpack.c.l.b16 %v1357
      %v1938 = vunpack.c.l.b16 %v1358
      %v1939 = vunpack.c.l.b16 %v1359
      %v1940 = vunpack.c.l.b16 %v1360
      %v1941 = vunpack.c.l.b16 %v1361
      %v1942 = vunpack.c.l.b16 %v1362
      %v1943 = vunpack.c.l.b16 %v1363
      %v1944 = vunpack.c.l.b16 %v1364
      %v1945 = vunpack.c.l.b16 %v1365
      %v1946 = vunpack.c.l.b16 %v1366
      %v1947 = vunpack.c.l.b16 %v1367
      %v1948 = vunpack.c.l.b16 %v1368
      %v1949 = vunpack.c.l.b16 %v1369
      %v1950 = vunpack.c.l.b16 %v1370
      %v1951 = vunpack.c.l.b16 %v1371
      %v1952 = vunpack.c.l.b16 %v1372
      %v1953 = vunpack.c.l.b16 %v1373
      %v1954 = vunpack.c.l.b16 %v1374
      %v1955 = vunpack.c.l.b16 %v1375
      %v1956 = vunpack.c.l.b16 %v1376
      %v1957 = vunpack.c.l.b16 %v1377
      %v1958 = vunpack.c.l.b16 %v1378
      %v1959 = vunpack.c.l.b16 %v1379
      %v1960 = vpack.c.b16 %v1881, %v1880
      %v1961 = vpack.c.b16 %v1883, %v1882
      %v1962 = vpack.c.b16 %v1885, %v1884
      %v1963 = vpack.c.b16 %v1887, %v1886
      %v1964 = vpack.c.b16 %v1889, %v1888
      %v1965 = vpack.c.b16 %v1891, %v1890
      %v1966 = vpack.c.b16 %v1893, %v1892
      %v1967 = vpack.c.b16 %v1895, %v1894
      %v1968 = vpack.c.b16 %v1897, %v1896
      %v1969 = vpack.c.b16 %v1899, %v1898
      %v1970 = vpack.c.b16 %v1901, %v1900
      %v1971 = vpack.c.b16 %v1903, %v1902
      %v1972 = vpack.c.b16 %v1905, %v1904
      %v1973 = vpack.c.b16 %v1907, %v1906
      %v1974 = vpack.c.b16 %v1909, %v1908
      %v1975 = vpack.c.b16 %v1911, %v1910
      %v1976 = vpack.c.b16 %v1913, %v1912
      %v1977 = vpack.c.b16 %v1915, %v1914
      %v1978 = vpack.c.b16 %v1917, %v1916
      %v1979 = vpack.c.b16 %v1919, %v1918
      %v1980 = vpack.c.b16 %v1921, %v1920
      %v1981 = vpack.c.b16 %v1923, %v1922
      %v1982 = vpack.c.b16 %v1925, %v1924
      %v1983 = vpack.c.b16 %v1927, %v1926
      %v1984 = vpack.c.b16 %v1929, %v1928
      %v1985 = vpack.c.b16 %v1931, %v1930
      %v1986 = vpack.c.b16 %v1933, %v1932
      %v1987 = vpack.c.b16 %v1935, %v1934
      %v1988 = vpack.c.b16 %v1937, %v1936
      %v1989 = vpack.c.b16 %v1939, %v1938
      %v1990 = vpack.c.b16 %v1941, %v1940
      %v1991 = vpack.c.b16 %v1943, %v1942
      %v1992 = vpack.c.b16 %v1945, %v1944
      %v1993 = vpack.c.b16 %v1947, %v1946
      %v1994 = vpack.c.b16 %v1949, %v1948
      %v1995 = vpack.c.b16 %v1951, %v1950
      %v1996 = vpack.c.b16 %v1953, %v1952
      %v1997 = vpack.c.b16 %v1955, %v1954
      %v1998 = vpack.c.b16 %v1957, %v1956
      %v1999 = vpack.c.b16 %v1959, %v1958
      %2040 = vmatpush.bf16.msra.mxu0 %v1967
      %2041 = vmatpush.bf16.msra.mxu0 %v1966
      %2042 = vmatpush.bf16.msra.mxu0 %v1965
      %2043 = vmatpush.bf16.msra.mxu0 %v1964
      %2044 = vmatpush.bf16.msra.mxu0 %v1963
      %2045 = vmatpush.bf16.msra.mxu0 %v1962
      %2046 = vmatpush.bf16.msra.mxu0 %v1961
      %2047 = vmatpush.bf16.msra.mxu0 %v1960
      %2048 = vmatmul.bf16.gmra.mxu0 %v1640
      %v2049 = vpop.f32.mrf.mxu0
      %v2050 = vadd.f32 %v1382, %v2049
      %v2051 = vpop.f32.mrf.mxu0
      %v2052 = vadd.f32 %v1382, %v2051
      %2053 = vmatmul.bf16.gmra.mxu0 %v1645
      %v2054 = vpop.f32.mrf.mxu0
      %v2055 = vadd.f32 %v1382, %v2054
      %v2056 = vpop.f32.mrf.mxu0
      %v2057 = vadd.f32 %v1382, %v2056
      %2058 = vmatmul.bf16.gmra.mxu0 %v1650
      %v2059 = vpop.f32.mrf.mxu0
      %v2060 = vadd.f32 %v1382, %v2059
      %v2061 = vpop.f32.mrf.mxu0
      %v2062 = vadd.f32 %v1382, %v2061
      %2063 = vmatmul.bf16.gmra.mxu0 %v1655
      %v2064 = vpop.f32.mrf.mxu0
      %v2065 = vadd.f32 %v1382, %v2064
      %v2066 = vpop.f32.mrf.mxu0
      %v2067 = vadd.f32 %v1382, %v2066
      %2068 = vmatmul.bf16.gmra.mxu0 %v1660
      %v2069 = vpop.f32.mrf.mxu0
      %v2070 = vadd.f32 %v1382, %v2069
      %v2071 = vpop.f32.mrf.mxu0
      %v2072 = vadd.f32 %v1382, %v2071
      %2073 = vmatmul.bf16.gmra.mxu0 %v1665
      %v2074 = vpop.f32.mrf.mxu0
      %v2075 = vadd.f32 %v1382, %v2074
      %v2076 = vpop.f32.mrf.mxu0
      %v2077 = vadd.f32 %v1382, %v2076
      %2078 = vmatmul.bf16.gmra.mxu0 %v1670
      %v2079 = vpop.f32.mrf.mxu0
      %v2080 = vadd.f32 %v1382, %v2079
      %v2081 = vpop.f32.mrf.mxu0
      %v2082 = vadd.f32 %v1382, %v2081
      %2083 = vmatmul.bf16.gmra.mxu0 %v1675
      %v2084 = vpop.f32.mrf.mxu0
      %v2085 = vadd.f32 %v1382, %v2084
      %v2086 = vpop.f32.mrf.mxu0
      %v2087 = vadd.f32 %v1382, %v2086
      %2088 = vmatmul.bf16.gmra.mxu0 %v1680
      %v2089 = vpop.f32.mrf.mxu0
      %v2090 = vadd.f32 %v1382, %v2089
      %v2091 = vpop.f32.mrf.mxu0
      %v2092 = vadd.f32 %v1382, %v2091
      %2093 = vmatmul.bf16.gmra.mxu0 %v1685
      %v2094 = vpop.f32.mrf.mxu0
      %v2095 = vadd.f32 %v1382, %v2094
      %v2096 = vpop.f32.mrf.mxu0
      %v2097 = vadd.f32 %v1382, %v2096
      %2098 = vmatmul.bf16.gmra.mxu0 %v1690
      %v2099 = vpop.f32.mrf.mxu0
      %v2100 = vadd.f32 %v1382, %v2099
      %v2101 = vpop.f32.mrf.mxu0
      %v2102 = vadd.f32 %v1382, %v2101
      %2103 = vmatmul.bf16.gmra.mxu0 %v1695
      %v2104 = vpop.f32.mrf.mxu0
      %v2105 = vadd.f32 %v1382, %v2104
      %v2106 = vpop.f32.mrf.mxu0
      %v2107 = vadd.f32 %v1382, %v2106
      %2108 = vmatmul.bf16.gmra.mxu0 %v1700
      %v2109 = vpop.f32.mrf.mxu0
      %v2110 = vadd.f32 %v1382, %v2109
      %v2111 = vpop.f32.mrf.mxu0
      %v2112 = vadd.f32 %v1382, %v2111
      %2113 = vmatmul.bf16.gmra.mxu0 %v1705
      %v2114 = vpop.f32.mrf.mxu0
      %v2115 = vadd.f32 %v1382, %v2114
      %v2116 = vpop.f32.mrf.mxu0
      %v2117 = vadd.f32 %v1382, %v2116
      %2118 = vmatmul.bf16.gmra.mxu0 %v1710
      %v2119 = vpop.f32.mrf.mxu0
      %v2120 = vadd.f32 %v1382, %v2119
      %v2121 = vpop.f32.mrf.mxu0
      %v2122 = vadd.f32 %v1382, %v2121
      %2123 = vmatmul.bf16.gmra.mxu0 %v1715
      %v2124 = vpop.f32.mrf.mxu0
      %v2125 = vadd.f32 %v1382, %v2124
      %v2126 = vpop.f32.mrf.mxu0
      %v2127 = vadd.f32 %v1382, %v2126
      %2128 = vdwg.mxu0
      %2129 = vmatpush.bf16.msra.mxu0 %v1975
      %2130 = vmatpush.bf16.msra.mxu0 %v1974
      %2131 = vmatpush.bf16.msra.mxu0 %v1973
      %2132 = vmatpush.bf16.msra.mxu0 %v1972
      %2133 = vmatpush.bf16.msra.mxu0 %v1971
      %2134 = vmatpush.bf16.msra.mxu0 %v1970
      %2135 = vmatpush.bf16.msra.mxu0 %v1969
      %2136 = vmatpush.bf16.msra.mxu0 %v1968
      %2137 = vmatmul.bf16.gmra.mxu0 %v1641
      %v2138 = vpop.f32.mrf.mxu0
      %v2139 = vadd.f32 %v2050, %v2138
      %v2140 = vpop.f32.mrf.mxu0
      %v2141 = vadd.f32 %v2052, %v2140
      %2142 = vmatmul.bf16.gmra.mxu0 %v1646
      %v2143 = vpop.f32.mrf.mxu0
      %v2144 = vadd.f32 %v2055, %v2143
      %v2145 = vpop.f32.mrf.mxu0
      %v2146 = vadd.f32 %v2057, %v2145
      %2147 = vmatmul.bf16.gmra.mxu0 %v1651
      %v2148 = vpop.f32.mrf.mxu0
      %v2149 = vadd.f32 %v2060, %v2148
      %v2150 = vpop.f32.mrf.mxu0
      %v2151 = vadd.f32 %v2062, %v2150
      %2152 = vmatmul.bf16.gmra.mxu0 %v1656
      %v2153 = vpop.f32.mrf.mxu0
      %v2154 = vadd.f32 %v2065, %v2153
      %v2155 = vpop.f32.mrf.mxu0
      %v2156 = vadd.f32 %v2067, %v2155
      %2157 = vmatmul.bf16.gmra.mxu0 %v1661
      %v2158 = vpop.f32.mrf.mxu0
      %v2159 = vadd.f32 %v2070, %v2158
      %v2160 = vpop.f32.mrf.mxu0
      %v2161 = vadd.f32 %v2072, %v2160
      %2162 = vmatmul.bf16.gmra.mxu0 %v1666
      %v2163 = vpop.f32.mrf.mxu0
      %v2164 = vadd.f32 %v2075, %v2163
      %v2165 = vpop.f32.mrf.mxu0
      %v2166 = vadd.f32 %v2077, %v2165
      %2167 = vmatmul.bf16.gmra.mxu0 %v1671
      %v2168 = vpop.f32.mrf.mxu0
      %v2169 = vadd.f32 %v2080, %v2168
      %v2170 = vpop.f32.mrf.mxu0
      %v2171 = vadd.f32 %v2082, %v2170
      %2172 = vmatmul.bf16.gmra.mxu0 %v1676
      %v2173 = vpop.f32.mrf.mxu0
      %v2174 = vadd.f32 %v2085, %v2173
      %v2175 = vpop.f32.mrf.mxu0
      %v2176 = vadd.f32 %v2087, %v2175
      %2177 = vmatmul.bf16.gmra.mxu0 %v1681
      %v2178 = vpop.f32.mrf.mxu0
      %v2179 = vadd.f32 %v2090, %v2178
      %v2180 = vpop.f32.mrf.mxu0
      %v2181 = vadd.f32 %v2092, %v2180
      %2182 = vmatmul.bf16.gmra.mxu0 %v1686
      %v2183 = vpop.f32.mrf.mxu0
      %v2184 = vadd.f32 %v2095, %v2183
      %v2185 = vpop.f32.mrf.mxu0
      %v2186 = vadd.f32 %v2097, %v2185
      %2187 = vmatmul.bf16.gmra.mxu0 %v1691
      %v2188 = vpop.f32.mrf.mxu0
      %v2189 = vadd.f32 %v2100, %v2188
      %v2190 = vpop.f32.mrf.mxu0
      %v2191 = vadd.f32 %v2102, %v2190
      %2192 = vmatmul.bf16.gmra.mxu0 %v1696
      %v2193 = vpop.f32.mrf.mxu0
      %v2194 = vadd.f32 %v2105, %v2193
      %v2195 = vpop.f32.mrf.mxu0
      %v2196 = vadd.f32 %v2107, %v2195
      %2197 = vmatmul.bf16.gmra.mxu0 %v1701
      %v2198 = vpop.f32.mrf.mxu0
      %v2199 = vadd.f32 %v2110, %v2198
      %v2200 = vpop.f32.mrf.mxu0
      %v2201 = vadd.f32 %v2112, %v2200
      %2202 = vmatmul.bf16.gmra.mxu0 %v1706
      %v2203 = vpop.f32.mrf.mxu0
      %v2204 = vadd.f32 %v2115, %v2203
      %v2205 = vpop.f32.mrf.mxu0
      %v2206 = vadd.f32 %v2117, %v2205
      %2207 = vmatmul.bf16.gmra.mxu0 %v1711
      %v2208 = vpop.f32.mrf.mxu0
      %v2209 = vadd.f32 %v2120, %v2208
      %v2210 = vpop.f32.mrf.mxu0
      %v2211 = vadd.f32 %v2122, %v2210
      %2212 = vmatmul.bf16.gmra.mxu0 %v1716
      %v2213 = vpop.f32.mrf.mxu0
      %v2214 = vadd.f32 %v2125, %v2213
      %v2215 = vpop.f32.mrf.mxu0
      %v2216 = vadd.f32 %v2127, %v2215
      %2217 = vdwg.mxu0
      %2218 = vmatpush.bf16.msra.mxu0 %v1983
      %2219 = vmatpush.bf16.msra.mxu0 %v1982
      %2220 = vmatpush.bf16.msra.mxu0 %v1981
      %2221 = vmatpush.bf16.msra.mxu0 %v1980
      %2222 = vmatpush.bf16.msra.mxu0 %v1979
      %2223 = vmatpush.bf16.msra.mxu0 %v1978
      %2224 = vmatpush.bf16.msra.mxu0 %v1977
      %2225 = vmatpush.bf16.msra.mxu0 %v1976
      %2226 = vmatmul.bf16.gmra.mxu0 %v1642
      %v2227 = vpop.f32.mrf.mxu0
      %v2228 = vadd.f32 %v2139, %v2227
      %v2229 = vpop.f32.mrf.mxu0
      %v2230 = vadd.f32 %v2141, %v2229
      %2231 = vmatmul.bf16.gmra.mxu0 %v1647
      %v2232 = vpop.f32.mrf.mxu0
      %v2233 = vadd.f32 %v2144, %v2232
      %v2234 = vpop.f32.mrf.mxu0
      %v2235 = vadd.f32 %v2146, %v2234
      %2236 = vmatmul.bf16.gmra.mxu0 %v1652
      %v2237 = vpop.f32.mrf.mxu0
      %v2238 = vadd.f32 %v2149, %v2237
      %v2239 = vpop.f32.mrf.mxu0
      %v2240 = vadd.f32 %v2151, %v2239
      %2241 = vmatmul.bf16.gmra.mxu0 %v1657
      %v2242 = vpop.f32.mrf.mxu0
      %v2243 = vadd.f32 %v2154, %v2242
      %v2244 = vpop.f32.mrf.mxu0
      %v2245 = vadd.f32 %v2156, %v2244
      %2246 = vmatmul.bf16.gmra.mxu0 %v1662
      %v2247 = vpop.f32.mrf.mxu0
      %v2248 = vadd.f32 %v2159, %v2247
      %v2249 = vpop.f32.mrf.mxu0
      %v2250 = vadd.f32 %v2161, %v2249
      %2251 = vmatmul.bf16.gmra.mxu0 %v1667
      %v2252 = vpop.f32.mrf.mxu0
      %v2253 = vadd.f32 %v2164, %v2252
      %v2254 = vpop.f32.mrf.mxu0
      %v2255 = vadd.f32 %v2166, %v2254
      %2256 = vmatmul.bf16.gmra.mxu0 %v1672
      %v2257 = vpop.f32.mrf.mxu0
      %v2258 = vadd.f32 %v2169, %v2257
      %v2259 = vpop.f32.mrf.mxu0
      %v2260 = vadd.f32 %v2171, %v2259
      %2261 = vmatmul.bf16.gmra.mxu0 %v1677
      %v2262 = vpop.f32.mrf.mxu0
      %v2263 = vadd.f32 %v2174, %v2262
      %v2264 = vpop.f32.mrf.mxu0
      %v2265 = vadd.f32 %v2176, %v2264
      %2266 = vmatmul.bf16.gmra.mxu0 %v1682
      %v2267 = vpop.f32.mrf.mxu0
      %v2268 = vadd.f32 %v2179, %v2267
      %v2269 = vpop.f32.mrf.mxu0
      %v2270 = vadd.f32 %v2181, %v2269
      %2271 = vmatmul.bf16.gmra.mxu0 %v1687
      %v2272 = vpop.f32.mrf.mxu0
      %v2273 = vadd.f32 %v2184, %v2272
      %v2274 = vpop.f32.mrf.mxu0
      %v2275 = vadd.f32 %v2186, %v2274
      %2276 = vmatmul.bf16.gmra.mxu0 %v1692
      %v2277 = vpop.f32.mrf.mxu0
      %v2278 = vadd.f32 %v2189, %v2277
      %v2279 = vpop.f32.mrf.mxu0
      %v2280 = vadd.f32 %v2191, %v2279
      %2281 = vmatmul.bf16.gmra.mxu0 %v1697
      %v2282 = vpop.f32.mrf.mxu0
      %v2283 = vadd.f32 %v2194, %v2282
      %v2284 = vpop.f32.mrf.mxu0
      %v2285 = vadd.f32 %v2196, %v2284
      %2286 = vmatmul.bf16.gmra.mxu0 %v1702
      %v2287 = vpop.f32.mrf.mxu0
      %v2288 = vadd.f32 %v2199, %v2287
      %v2289 = vpop.f32.mrf.mxu0
      %v2290 = vadd.f32 %v2201, %v2289
      %2291 = vmatmul.bf16.gmra.mxu0 %v1707
      %v2292 = vpop.f32.mrf.mxu0
      %v2293 = vadd.f32 %v2204, %v2292
      %v2294 = vpop.f32.mrf.mxu0
      %v2295 = vadd.f32 %v2206, %v2294
      %2296 = vmatmul.bf16.gmra.mxu0 %v1712
      %v2297 = vpop.f32.mrf.mxu0
      %v2298 = vadd.f32 %v2209, %v2297
      %v2299 = vpop.f32.mrf.mxu0
      %v2300 = vadd.f32 %v2211, %v2299
      %2301 = vmatmul.bf16.gmra.mxu0 %v1717
      %v2302 = vpop.f32.mrf.mxu0
      %v2303 = vadd.f32 %v2214, %v2302
      %v2304 = vpop.f32.mrf.mxu0
      %v2305 = vadd.f32 %v2216, %v2304
      %2306 = vdwg.mxu0
      %2307 = vmatpush.bf16.msra.mxu0 %v1991
      %2308 = vmatpush.bf16.msra.mxu0 %v1990
      %2309 = vmatpush.bf16.msra.mxu0 %v1989
      %2310 = vmatpush.bf16.msra.mxu0 %v1988
      %2311 = vmatpush.bf16.msra.mxu0 %v1987
      %2312 = vmatpush.bf16.msra.mxu0 %v1986
      %2313 = vmatpush.bf16.msra.mxu0 %v1985
      %2314 = vmatpush.bf16.msra.mxu0 %v1984
      %2315 = vmatmul.bf16.gmra.mxu0 %v1643
      %v2316 = vpop.f32.mrf.mxu0
      %v2317 = vadd.f32 %v2228, %v2316
      %v2318 = vpop.f32.mrf.mxu0
      %v2319 = vadd.f32 %v2230, %v2318
      %2320 = vmatmul.bf16.gmra.mxu0 %v1648
      %v2321 = vpop.f32.mrf.mxu0
      %v2322 = vadd.f32 %v2233, %v2321
      %v2323 = vpop.f32.mrf.mxu0
      %v2324 = vadd.f32 %v2235, %v2323
      %2325 = vmatmul.bf16.gmra.mxu0 %v1653
      %v2326 = vpop.f32.mrf.mxu0
      %v2327 = vadd.f32 %v2238, %v2326
      %v2328 = vpop.f32.mrf.mxu0
      %v2329 = vadd.f32 %v2240, %v2328
      %2330 = vmatmul.bf16.gmra.mxu0 %v1658
      %v2331 = vpop.f32.mrf.mxu0
      %v2332 = vadd.f32 %v2243, %v2331
      %v2333 = vpop.f32.mrf.mxu0
      %v2334 = vadd.f32 %v2245, %v2333
      %2335 = vmatmul.bf16.gmra.mxu0 %v1663
      %v2336 = vpop.f32.mrf.mxu0
      %v2337 = vadd.f32 %v2248, %v2336
      %v2338 = vpop.f32.mrf.mxu0
      %v2339 = vadd.f32 %v2250, %v2338
      %2340 = vmatmul.bf16.gmra.mxu0 %v1668
      %v2341 = vpop.f32.mrf.mxu0
      %v2342 = vadd.f32 %v2253, %v2341
      %v2343 = vpop.f32.mrf.mxu0
      %v2344 = vadd.f32 %v2255, %v2343
      %2345 = vmatmul.bf16.gmra.mxu0 %v1673
      %v2346 = vpop.f32.mrf.mxu0
      %v2347 = vadd.f32 %v2258, %v2346
      %v2348 = vpop.f32.mrf.mxu0
      %v2349 = vadd.f32 %v2260, %v2348
      %2350 = vmatmul.bf16.gmra.mxu0 %v1678
      %v2351 = vpop.f32.mrf.mxu0
      %v2352 = vadd.f32 %v2263, %v2351
      %v2353 = vpop.f32.mrf.mxu0
      %v2354 = vadd.f32 %v2265, %v2353
      %2355 = vmatmul.bf16.gmra.mxu0 %v1683
      %v2356 = vpop.f32.mrf.mxu0
      %v2357 = vadd.f32 %v2268, %v2356
      %v2358 = vpop.f32.mrf.mxu0
      %v2359 = vadd.f32 %v2270, %v2358
      %2360 = vmatmul.bf16.gmra.mxu0 %v1688
      %v2361 = vpop.f32.mrf.mxu0
      %v2362 = vadd.f32 %v2273, %v2361
      %v2363 = vpop.f32.mrf.mxu0
      %v2364 = vadd.f32 %v2275, %v2363
      %2365 = vmatmul.bf16.gmra.mxu0 %v1693
      %v2366 = vpop.f32.mrf.mxu0
      %v2367 = vadd.f32 %v2278, %v2366
      %v2368 = vpop.f32.mrf.mxu0
      %v2369 = vadd.f32 %v2280, %v2368
      %2370 = vmatmul.bf16.gmra.mxu0 %v1698
      %v2371 = vpop.f32.mrf.mxu0
      %v2372 = vadd.f32 %v2283, %v2371
      %v2373 = vpop.f32.mrf.mxu0
      %v2374 = vadd.f32 %v2285, %v2373
      %2375 = vmatmul.bf16.gmra.mxu0 %v1703
      %v2376 = vpop.f32.mrf.mxu0
      %v2377 = vadd.f32 %v2288, %v2376
      %v2378 = vpop.f32.mrf.mxu0
      %v2379 = vadd.f32 %v2290, %v2378
      %2380 = vmatmul.bf16.gmra.mxu0 %v1708
      %v2381 = vpop.f32.mrf.mxu0
      %v2382 = vadd.f32 %v2293, %v2381
      %v2383 = vpop.f32.mrf.mxu0
      %v2384 = vadd.f32 %v2295, %v2383
      %2385 = vmatmul.bf16.gmra.mxu0 %v1713
      %v2386 = vpop.f32.mrf.mxu0
      %v2387 = vadd.f32 %v2298, %v2386
      %v2388 = vpop.f32.mrf.mxu0
      %v2389 = vadd.f32 %v2300, %v2388
      %2390 = vmatmul.bf16.gmra.mxu0 %v1718
      %v2391 = vpop.f32.mrf.mxu0
      %v2392 = vadd.f32 %v2303, %v2391
      %v2393 = vpop.f32.mrf.mxu0
      %v2394 = vadd.f32 %v2305, %v2393
      %2395 = vdwg.mxu0
      %2396 = vmatpush.bf16.msra.mxu0 %v1999
      %2397 = vmatpush.bf16.msra.mxu0 %v1998
      %2398 = vmatpush.bf16.msra.mxu0 %v1997
      %2399 = vmatpush.bf16.msra.mxu0 %v1996
      %2400 = vmatpush.bf16.msra.mxu0 %v1995
      %2401 = vmatpush.bf16.msra.mxu0 %v1994
      %2402 = vmatpush.bf16.msra.mxu0 %v1993
      %2403 = vmatpush.bf16.msra.mxu0 %v1992
      %2404 = vmatmul.bf16.gmra.mxu0 %v1644
      %v2405 = vpop.f32.mrf.mxu0
      %v2406 = vadd.f32 %v2317, %v2405
      %v2407 = vpop.f32.mrf.mxu0
      %v2408 = vadd.f32 %v2319, %v2407
      %2409 = vmatmul.bf16.gmra.mxu0 %v1649
      %v2410 = vpop.f32.mrf.mxu0
      %v2411 = vadd.f32 %v2322, %v2410
      %v2412 = vpop.f32.mrf.mxu0
      %v2413 = vadd.f32 %v2324, %v2412
      %2414 = vmatmul.bf16.gmra.mxu0 %v1654
      %v2415 = vpop.f32.mrf.mxu0
      %v2416 = vadd.f32 %v2327, %v2415
      %v2417 = vpop.f32.mrf.mxu0
      %v2418 = vadd.f32 %v2329, %v2417
      %2419 = vmatmul.bf16.gmra.mxu0 %v1659
      %v2420 = vpop.f32.mrf.mxu0
      %v2421 = vadd.f32 %v2332, %v2420
      %v2422 = vpop.f32.mrf.mxu0
      %v2423 = vadd.f32 %v2334, %v2422
      %2424 = vmatmul.bf16.gmra.mxu0 %v1664
      %v2425 = vpop.f32.mrf.mxu0
      %v2426 = vadd.f32 %v2337, %v2425
      %v2427 = vpop.f32.mrf.mxu0
      %v2428 = vadd.f32 %v2339, %v2427
      %2429 = vmatmul.bf16.gmra.mxu0 %v1669
      %v2430 = vpop.f32.mrf.mxu0
      %v2431 = vadd.f32 %v2342, %v2430
      %v2432 = vpop.f32.mrf.mxu0
      %v2433 = vadd.f32 %v2344, %v2432
      %2434 = vmatmul.bf16.gmra.mxu0 %v1674
      %v2435 = vpop.f32.mrf.mxu0
      %v2436 = vadd.f32 %v2347, %v2435
      %v2437 = vpop.f32.mrf.mxu0
      %v2438 = vadd.f32 %v2349, %v2437
      %2439 = vmatmul.bf16.gmra.mxu0 %v1679
      %v2440 = vpop.f32.mrf.mxu0
      %v2441 = vadd.f32 %v2352, %v2440
      %v2442 = vpop.f32.mrf.mxu0
      %v2443 = vadd.f32 %v2354, %v2442
      %2444 = vmatmul.bf16.gmra.mxu0 %v1684
      %v2445 = vpop.f32.mrf.mxu0
      %v2446 = vadd.f32 %v2357, %v2445
      %v2447 = vpop.f32.mrf.mxu0
      %v2448 = vadd.f32 %v2359, %v2447
      %2449 = vmatmul.bf16.gmra.mxu0 %v1689
      %v2450 = vpop.f32.mrf.mxu0
      %v2451 = vadd.f32 %v2362, %v2450
      %v2452 = vpop.f32.mrf.mxu0
      %v2453 = vadd.f32 %v2364, %v2452
      %2454 = vmatmul.bf16.gmra.mxu0 %v1694
      %v2455 = vpop.f32.mrf.mxu0
      %v2456 = vadd.f32 %v2367, %v2455
      %v2457 = vpop.f32.mrf.mxu0
      %v2458 = vadd.f32 %v2369, %v2457
      %2459 = vmatmul.bf16.gmra.mxu0 %v1699
      %v2460 = vpop.f32.mrf.mxu0
      %v2461 = vadd.f32 %v2372, %v2460
      %v2462 = vpop.f32.mrf.mxu0
      %v2463 = vadd.f32 %v2374, %v2462
      %2464 = vmatmul.bf16.gmra.mxu0 %v1704
      %v2465 = vpop.f32.mrf.mxu0
      %v2466 = vadd.f32 %v2377, %v2465
      %v2467 = vpop.f32.mrf.mxu0
      %v2468 = vadd.f32 %v2379, %v2467
      %2469 = vmatmul.bf16.gmra.mxu0 %v1709
      %v2470 = vpop.f32.mrf.mxu0
      %v2471 = vadd.f32 %v2382, %v2470
      %v2472 = vpop.f32.mrf.mxu0
      %v2473 = vadd.f32 %v2384, %v2472
      %2474 = vmatmul.bf16.gmra.mxu0 %v1714
      %v2475 = vpop.f32.mrf.mxu0
      %v2476 = vadd.f32 %v2387, %v2475
      %v2477 = vpop.f32.mrf.mxu0
      %v2478 = vadd.f32 %v2389, %v2477
      %2479 = vmatmul.bf16.gmra.mxu0 %v1719
      %v2480 = vpop.f32.mrf.mxu0
      %v2481 = vadd.f32 %v2392, %v2480
      %v2482 = vpop.f32.mrf.mxu0
      %v2483 = vadd.f32 %v2394, %v2482
      %2484 = vdwg.mxu0
      %v2485 = vmax.f32 %v2406, 0.0
      %v2486 = vmax.f32 %v2408, 0.0
      %v2487 = vmax.f32 %v2411, 0.0
      %v2488 = vmax.f32 %v2413, 0.0
      %v2489 = vmax.f32 %v2416, 0.0
      %v2490 = vmax.f32 %v2418, 0.0
      %v2491 = vmax.f32 %v2421, 0.0
      %v2492 = vmax.f32 %v2423, 0.0
      %v2493 = vmax.f32 %v2426, 0.0
      %v2494 = vmax.f32 %v2428, 0.0
      %v2495 = vmax.f32 %v2431, 0.0
      %v2496 = vmax.f32 %v2433, 0.0
      %v2497 = vmax.f32 %v2436, 0.0
      %v2498 = vmax.f32 %v2438, 0.0
      %v2499 = vmax.f32 %v2441, 0.0
      %v2500 = vmax.f32 %v2443, 0.0
      %v2501 = vmax.f32 %v2446, 0.0
      %v2502 = vmax.f32 %v2448, 0.0
      %v2503 = vmax.f32 %v2451, 0.0
      %v2504 = vmax.f32 %v2453, 0.0
      %v2505 = vmax.f32 %v2456, 0.0
      %v2506 = vmax.f32 %v2458, 0.0
      %v2507 = vmax.f32 %v2461, 0.0
      %v2508 = vmax.f32 %v2463, 0.0
      %v2509 = vmax.f32 %v2466, 0.0
      %v2510 = vmax.f32 %v2468, 0.0
      %v2511 = vmax.f32 %v2471, 0.0
      %v2512 = vmax.f32 %v2473, 0.0
      %v2513 = vmax.f32 %v2476, 0.0
      %v2514 = vmax.f32 %v2478, 0.0
      %v2515 = vmax.f32 %v2481, 0.0
      %v2516 = vmax.f32 %v2483, 0.0
      %v2517 = vpack.c.bf16 %v2486, %v2485
      %v2518 = vpack.c.bf16 %v2488, %v2487
      %v2519 = vpack.c.bf16 %v2490, %v2489
      %v2520 = vpack.c.bf16 %v2492, %v2491
      %v2521 = vpack.c.bf16 %v2494, %v2493
      %v2522 = vpack.c.bf16 %v2496, %v2495
      %v2523 = vpack.c.bf16 %v2498, %v2497
      %v2524 = vpack.c.bf16 %v2500, %v2499
      %v2525 = vpack.c.bf16 %v2502, %v2501
      %v2526 = vpack.c.bf16 %v2504, %v2503
      %v2527 = vpack.c.bf16 %v2506, %v2505
      %v2528 = vpack.c.bf16 %v2508, %v2507
      %v2529 = vpack.c.bf16 %v2510, %v2509
      %v2530 = vpack.c.bf16 %v2512, %v2511
      %v2531 = vpack.c.bf16 %v2514, %v2513
      %v2532 = vpack.c.bf16 %v2516, %v2515
      %v2533 = vld [vmem:[%s3] sm:$0xf]
      %v2534 = vld [vmem:[%s3 + $0x4] sm:$0xf]
      %v2535 = vld [vmem:[%s3 + $0x8] sm:$0xf]
      %v2536 = vld [vmem:[%s3 + $0xc] sm:$0xf]
      %v2537 = vld [vmem:[%s3 + $0x10] sm:$0xf]
      %v2538 = vld [vmem:[%s3 + $0x14] sm:$0xf]
      %v2539 = vld [vmem:[%s3 + $0x18] sm:$0xf]
      %v2540 = vld [vmem:[%s3 + $0x1c] sm:$0xf]
      %v2541 = vld [vmem:[%s3 + $0x20] sm:$0xf]
      %v2542 = vld [vmem:[%s3 + $0x24] sm:$0xf]
      %v2543 = vld [vmem:[%s3 + $0x28] sm:$0xf]
      %v2544 = vld [vmem:[%s3 + $0x2c] sm:$0xf]
      %v2545 = vld [vmem:[%s3 + $0x30] sm:$0xf]
      %v2546 = vld [vmem:[%s3 + $0x34] sm:$0xf]
      %v2547 = vld [vmem:[%s3 + $0x38] sm:$0xf]
      %v2548 = vld [vmem:[%s3 + $0x3c] sm:$0xf]
      %v2565 = vunpack.c.l.b16 %v2533
      %v2566 = vunpack.c.l.b16 %v2534
      %v2567 = vunpack.c.l.b16 %v2535
      %v2568 = vunpack.c.l.b16 %v2536
      %v2569 = vunpack.c.l.b16 %v2537
      %v2570 = vunpack.c.l.b16 %v2538
      %v2571 = vunpack.c.l.b16 %v2539
      %v2572 = vunpack.c.l.b16 %v2540
      %v2573 = vunpack.c.l.b16 %v2541
      %v2574 = vunpack.c.l.b16 %v2542
      %v2575 = vunpack.c.l.b16 %v2543
      %v2576 = vunpack.c.l.b16 %v2544
      %v2577 = vunpack.c.l.b16 %v2545
      %v2578 = vunpack.c.l.b16 %v2546
      %v2579 = vunpack.c.l.b16 %v2547
      %v2580 = vunpack.c.l.b16 %v2548
      %v2581 = vpack.c.b16 %v2566, %v2565
      %v2582 = vpack.c.b16 %v2568, %v2567
      %v2583 = vpack.c.b16 %v2570, %v2569
      %v2584 = vpack.c.b16 %v2572, %v2571
      %v2585 = vpack.c.b16 %v2574, %v2573
      %v2586 = vpack.c.b16 %v2576, %v2575
      %v2587 = vpack.c.b16 %v2578, %v2577
      %v2588 = vpack.c.b16 %v2580, %v2579
      %2597 = vmatpush.bf16.msra.mxu0 %v2588
      %2598 = vmatpush.bf16.msra.mxu0 %v2587
      %2599 = vmatpush.bf16.msra.mxu0 %v2586
      %2600 = vmatpush.bf16.msra.mxu0 %v2585
      %2601 = vmatpush.bf16.msra.mxu0 %v2584
      %2602 = vmatpush.bf16.msra.mxu0 %v2583
      %2603 = vmatpush.bf16.msra.mxu0 %v2582
      %2604 = vmatpush.bf16.msra.mxu0 %v2581
      %2605 = vmatmul.bf16.gmra.mxu0 %v2517
      %v2606 = vpop.f32.mrf.mxu0
      %v2607 = vadd.f32 0.0, %v2606
      %v2608 = vpop.f32.mrf.mxu0
      %v2609 = vadd.f32 0.0, %v2608
      %2610 = vmatmul.bf16.gmra.mxu0 %v2518
      %v2611 = vpop.f32.mrf.mxu0
      %v2612 = vadd.f32 0.0, %v2611
      %v2613 = vpop.f32.mrf.mxu0
      %v2614 = vadd.f32 0.0, %v2613
      %2615 = vmatmul.bf16.gmra.mxu0 %v2519
      %v2616 = vpop.f32.mrf.mxu0
      %v2617 = vadd.f32 0.0, %v2616
      %v2618 = vpop.f32.mrf.mxu0
      %v2619 = vadd.f32 0.0, %v2618
      %2620 = vmatmul.bf16.gmra.mxu0 %v2520
      %v2621 = vpop.f32.mrf.mxu0
      %v2622 = vadd.f32 0.0, %v2621
      %v2623 = vpop.f32.mrf.mxu0
      %v2624 = vadd.f32 0.0, %v2623
      %2625 = vmatmul.bf16.gmra.mxu0 %v2521
      %v2626 = vpop.f32.mrf.mxu0
      %v2627 = vadd.f32 0.0, %v2626
      %v2628 = vpop.f32.mrf.mxu0
      %v2629 = vadd.f32 0.0, %v2628
      %2630 = vmatmul.bf16.gmra.mxu0 %v2522
      %v2631 = vpop.f32.mrf.mxu0
      %v2632 = vadd.f32 0.0, %v2631
      %v2633 = vpop.f32.mrf.mxu0
      %v2634 = vadd.f32 0.0, %v2633
      %2635 = vmatmul.bf16.gmra.mxu0 %v2523
      %v2636 = vpop.f32.mrf.mxu0
      %v2637 = vadd.f32 0.0, %v2636
      %v2638 = vpop.f32.mrf.mxu0
      %v2639 = vadd.f32 0.0, %v2638
      %2640 = vmatmul.bf16.gmra.mxu0 %v2524
      %v2641 = vpop.f32.mrf.mxu0
      %v2642 = vadd.f32 0.0, %v2641
      %v2643 = vpop.f32.mrf.mxu0
      %v2644 = vadd.f32 0.0, %v2643
      %2645 = vmatmul.bf16.gmra.mxu0 %v2525
      %v2646 = vpop.f32.mrf.mxu0
      %v2647 = vadd.f32 0.0, %v2646
      %v2648 = vpop.f32.mrf.mxu0
      %v2649 = vadd.f32 0.0, %v2648
      %2650 = vmatmul.bf16.gmra.mxu0 %v2526
      %v2651 = vpop.f32.mrf.mxu0
      %v2652 = vadd.f32 0.0, %v2651
      %v2653 = vpop.f32.mrf.mxu0
      %v2654 = vadd.f32 0.0, %v2653
      %2655 = vmatmul.bf16.gmra.mxu0 %v2527
      %v2656 = vpop.f32.mrf.mxu0
      %v2657 = vadd.f32 0.0, %v2656
      %v2658 = vpop.f32.mrf.mxu0
      %v2659 = vadd.f32 0.0, %v2658
      %2660 = vmatmul.bf16.gmra.mxu0 %v2528
      %v2661 = vpop.f32.mrf.mxu0
      %v2662 = vadd.f32 0.0, %v2661
      %v2663 = vpop.f32.mrf.mxu0
      %v2664 = vadd.f32 0.0, %v2663
      %2665 = vmatmul.bf16.gmra.mxu0 %v2529
      %v2666 = vpop.f32.mrf.mxu0
      %v2667 = vadd.f32 0.0, %v2666
      %v2668 = vpop.f32.mrf.mxu0
      %v2669 = vadd.f32 0.0, %v2668
      %2670 = vmatmul.bf16.gmra.mxu0 %v2530
      %v2671 = vpop.f32.mrf.mxu0
      %v2672 = vadd.f32 0.0, %v2671
      %v2673 = vpop.f32.mrf.mxu0
      %v2674 = vadd.f32 0.0, %v2673
      %2675 = vmatmul.bf16.gmra.mxu0 %v2531
      %v2676 = vpop.f32.mrf.mxu0
      %v2677 = vadd.f32 0.0, %v2676
      %v2678 = vpop.f32.mrf.mxu0
      %v2679 = vadd.f32 0.0, %v2678
      %2680 = vmatmul.bf16.gmra.mxu0 %v2532
      %v2681 = vpop.f32.mrf.mxu0
      %v2682 = vadd.f32 0.0, %v2681
      %v2683 = vpop.f32.mrf.mxu0
      %v2684 = vadd.f32 0.0, %v2683
      %2685 = vdwg.mxu0
      %v2686 = vpack.c.bf16 %v2607, %v2607
      %v2687 = vpack.c.bf16 %v2609, %v2609
      %v2688 = vpack.c.bf16 %v2612, %v2612
      %v2689 = vpack.c.bf16 %v2614, %v2614
      %v2690 = vpack.c.bf16 %v2617, %v2617
      %v2691 = vpack.c.bf16 %v2619, %v2619
      %v2692 = vpack.c.bf16 %v2622, %v2622
      %v2693 = vpack.c.bf16 %v2624, %v2624
      %v2694 = vpack.c.bf16 %v2627, %v2627
      %v2695 = vpack.c.bf16 %v2629, %v2629
      %v2696 = vpack.c.bf16 %v2632, %v2632
      %v2697 = vpack.c.bf16 %v2634, %v2634
      %v2698 = vpack.c.bf16 %v2637, %v2637
      %v2699 = vpack.c.bf16 %v2639, %v2639
      %v2700 = vpack.c.bf16 %v2642, %v2642
      %v2701 = vpack.c.bf16 %v2644, %v2644
      %v2702 = vpack.c.bf16 %v2647, %v2647
      %v2703 = vpack.c.bf16 %v2649, %v2649
      %v2704 = vpack.c.bf16 %v2652, %v2652
      %v2705 = vpack.c.bf16 %v2654, %v2654
      %v2706 = vpack.c.bf16 %v2657, %v2657
      %v2707 = vpack.c.bf16 %v2659, %v2659
      %v2708 = vpack.c.bf16 %v2662, %v2662
      %v2709 = vpack.c.bf16 %v2664, %v2664
      %v2710 = vpack.c.bf16 %v2667, %v2667
      %v2711 = vpack.c.bf16 %v2669, %v2669
      %v2712 = vpack.c.bf16 %v2672, %v2672
      %v2713 = vpack.c.bf16 %v2674, %v2674
      %v2714 = vpack.c.bf16 %v2677, %v2677
      %v2715 = vpack.c.bf16 %v2679, %v2679
      %v2716 = vpack.c.bf16 %v2682, %v2682
      %v2717 = vpack.c.bf16 %v2684, %v2684
      %2718 = vst [vmem:[%s197] sm:$0xf] %v2686
      %2719 = vst [vmem:[%s197 + $0x4] sm:$0xf] %v2687
      %2720 = vst [vmem:[%s197 + $0x8] sm:$0xf] %v2688
      %2721 = vst [vmem:[%s197 + $0xc] sm:$0xf] %v2689
      %2722 = vst [vmem:[%s197 + $0x10] sm:$0xf] %v2690
      %2723 = vst [vmem:[%s197 + $0x14] sm:$0xf] %v2691
      %2724 = vst [vmem:[%s197 + $0x18] sm:$0xf] %v2692
      %2725 = vst [vmem:[%s197 + $0x1c] sm:$0xf] %v2693
      %2726 = vst [vmem:[%s197 + $0x20] sm:$0xf] %v2694
      %2727 = vst [vmem:[%s197 + $0x24] sm:$0xf] %v2695
      %2728 = vst [vmem:[%s197 + $0x28] sm:$0xf] %v2696
      %2729 = vst [vmem:[%s197 + $0x2c] sm:$0xf] %v2697
      %2730 = vst [vmem:[%s197 + $0x30] sm:$0xf] %v2698
      %2731 = vst [vmem:[%s197 + $0x34] sm:$0xf] %v2699
      %2732 = vst [vmem:[%s197 + $0x38] sm:$0xf] %v2700
      %2733 = vst [vmem:[%s197 + $0x3c] sm:$0xf] %v2701
      %2734 = vst [vmem:[%s197 + $0x40] sm:$0xf] %v2702
      %2735 = vst [vmem:[%s197 + $0x44] sm:$0xf] %v2703
      %2736 = vst [vmem:[%s197 + $0x48] sm:$0xf] %v2704
      %2737 = vst [vmem:[%s197 + $0x4c] sm:$0xf] %v2705
      %2738 = vst [vmem:[%s197 + $0x50] sm:$0xf] %v2706
      %2739 = vst [vmem:[%s197 + $0x54] sm:$0xf] %v2707
      %2740 = vst [vmem:[%s197 + $0x58] sm:$0xf] %v2708
      %2741 = vst [vmem:[%s197 + $0x5c] sm:$0xf] %v2709
      %2742 = vst [vmem:[%s197 + $0x60] sm:$0xf] %v2710
      %2743 = vst [vmem:[%s197 + $0x64] sm:$0xf] %v2711
      %2744 = vst [vmem:[%s197 + $0x68] sm:$0xf] %v2712
      %2745 = vst [vmem:[%s197 + $0x6c] sm:$0xf] %v2713
      %2746 = vst [vmem:[%s197 + $0x70] sm:$0xf] %v2714
      %2747 = vst [vmem:[%s197 + $0x74] sm:$0xf] %v2715
      %2748 = vst [vmem:[%s197 + $0x78] sm:$0xf] %v2716
      %2749 = vst [vmem:[%s197 + $0x7c] sm:$0xf] %v2717
      %s2750 = smul.u32 32, %s15
      %p2751 = scmp.lt.s32.totalorder %s2750, 63
      %s2752 = scalar_select %p2751, %s2750, 63
      %s2753 = smul.addr %s2752, 4
      %s2754 = scalar_lea.vmem %s4, %s2753
      // Predicated region
      $region37: #{seg_head_forward.1} parent=35 // pred_check
        %p2755 = pneg %p122
      $region38: #{seg_head_forward.1} parent=35 // pred_check_branch
        %2757 = sbr.rel (%p2755) target = $region40
      $region39: #{seg_head_forward.1} parent=35 // pred_region
        %s2758 = smul.u32 32, %s15
      $region40: #{seg_head_forward.1} parent=35 // pred_fallthru
        _
    $region36: #{seg_head_forward.1} parent=5 // pred_fallthru
      _
    %p2759 = scmp.le.s32.totalorder 2, %s10
    // Predicated region
    $region41: #{seg_head_forward.1} parent=5 // pred_check
      %p2760 = pneg %p2759
    $region42: #{seg_head_forward.1} parent=5 // pred_check_branch
      %2762 = sbr.rel (%p2760) target = $region44
    $region43: #{seg_head_forward.1} parent=5 // pred_region
      %s2763 = ssub.s32 %s10, 2
      // Predicated region
      $region45: #{seg_head_forward.1} parent=43 // pred_check
        %p2764 = pneg %p128
      $region46: #{seg_head_forward.1} parent=43 // pred_check_branch
        %2766 = sbr.rel (%p2764) target = $region48
      $region47: #{seg_head_forward.1} parent=43 // pred_region
        %s2767 = smul.u32 32, %s16
        %p2768 = scmp.lt.s32.totalorder %s2767, 63
        %s2769 = scalar_select %p2768, %s2767, 63
        %s2770 = smul.addr %s2769, 4
        %s2771 = scalar_lea.vmem %s4, %s2770
      $region48: #{seg_head_forward.1} parent=43 // pred_fallthru
        _
    $region44: #{seg_head_forward.1} parent=5 // pred_fallthru
      _
  $region6: #{seg_head_forward.1} parent=0 // loop_footer
    %s14 = sadd.s32 1, %s10
  $region7: #{seg_head_forward.1} parent=0 // loop_footer_branch
    %9 = sbr.rel target = $region3
  $region8: #{seg_head_forward.1} parent=0 // loop_exit
    _

</llo_original>
